<compile_context>
chip_gen: v7x
topology: tpu7x:2x2x1
jax: 0.10.0
libtpu: 0.0.40
codegen_flags: <defaults>
</compile_context>

<pallas_src>
import functools

import jax
import jax.numpy as jnp
from jax.experimental import pallas as pl
from jax.experimental.pallas import tpu as pltpu


# -----------------------------------------------------------------------------
# Pallas kernels (channel-major: outputs are (Cout, M) with M lane-dense)
# -----------------------------------------------------------------------------
def _conv_bias_lrelu_kernel(pT_ref, wT_ref, b_ref, o_ref):
    """out = LeakyReLU_0.2(W @ P + b); one MXU dot per tile, f32 epilogue."""
    acc = jnp.dot(wT_ref[...], pT_ref[...], preferred_element_type=jnp.float32)
    acc = acc + b_ref[...]                                  # (Cout, 1) broadcast
    o_ref[...] = jnp.where(acc >= 0.0, acc, 0.2 * acc).astype(o_ref.dtype)


def _conv_bn_lrelu_kernel(pT_ref, wT_ref, gb_ref, o_ref, *, eps, inv_m):
    """out = LeakyReLU_0.2(BatchNorm(W @ P)); batch stats computed in-kernel."""
    acc = jnp.dot(wT_ref[...], pT_ref[...], preferred_element_type=jnp.float32)
    mean = jnp.sum(acc, axis=1, keepdims=True) * inv_m      # (Cout, 1)
    diff = acc - mean
    var = jnp.maximum(jnp.sum(diff * diff, axis=1, keepdims=True) * inv_m, 0.0)
    inv = jax.lax.rsqrt(var + eps)
    gb = gb_ref[...]                                        # (Cout, 2): gamma, beta
    y = diff * (gb[:, 0:1] * inv) + gb[:, 1:2]
    o_ref[...] = jnp.where(y >= 0.0, y, 0.2 * y).astype(o_ref.dtype)


def _conv_tail_kernel(pT_ref, w4T_ref, gb_ref, w5_ref, sel_ref, b5_ref, o_ref,
                      *, eps, inv_m):
    """Layer 4 (conv+BN+LeakyReLU) fused with layer 5 (full-window conv+sigmoid)."""
    acc = jnp.dot(w4T_ref[...], pT_ref[...], preferred_element_type=jnp.float32)
    mean = jnp.sum(acc, axis=1, keepdims=True) * inv_m
    diff = acc - mean
    var = jnp.maximum(jnp.sum(diff * diff, axis=1, keepdims=True) * inv_m, 0.0)
    inv = jax.lax.rsqrt(var + eps)
    gb = gb_ref[...]
    y = diff * (gb[:, 0:1] * inv) + gb[:, 1:2]
    y = jnp.where(y >= 0.0, y, 0.2 * y)                     # (C4, M4) f32
    # Layer 5: out[n] = sigmoid(b5 + sum_{h,w,c} y4[n,h,w,c] * W5[0,c,h,w]).
    z = y * w5_ref[...]                                     # per-element weights
    per_img = jnp.dot(z, sel_ref[...],                      # (C4, N) group sums
                      preferred_element_type=jnp.float32)
    logits = jnp.sum(per_img, axis=0, keepdims=True) + b5_ref[...]   # (1, N)
    o_ref[...] = jax.nn.sigmoid(logits)


# -----------------------------------------------------------------------------
# Pallas wrappers
# -----------------------------------------------------------------------------
def _pick_col_tile(m):
    # Prefer large tiles (per-step overhead ~0.35us) but keep >=4 grid steps so
    # v7x megacore sharding / DMA pipelining has work; worth sweeping.
    for tm in (1024, 512, 256):
        if m % tm == 0 and m // tm >= 4:
            return tm
    return m  # full extent (always legal)


def _vmem_params(block_bytes, semantics):
    # Raise v5e's 16 MiB default scoped VMEM; stay below v7x's 64 MiB physical.
    limit = int(min(max(2 * block_bytes + (4 << 20), 32 << 20), 60 << 20))
    return pltpu.CompilerParams(dimension_semantics=semantics,
                                vmem_limit_bytes=limit)


def conv_bias_lrelu(patches_t, w_t, bias):
    """patches_t: (16*Cin, M) bf16; w_t: (Cout, 16*Cin) bf16; bias: (Cout, 1) f32."""
    KK, M = patches_t.shape
    Cout = w_t.shape[0]
    tm = _pick_col_tile(M)
    blk = KK * tm * 2 + Cout * KK * 2 + Cout * 4 + Cout * tm * 2 + Cout * tm * 4
    return pl.pallas_call(
        _conv_bias_lrelu_kernel,
        out_shape=jax.ShapeDtypeStruct((Cout, M), jnp.bfloat16),
        grid_spec=pltpu.PrefetchScalarGridSpec(
            num_scalar_prefetch=0,
            grid=(M // tm,),
            in_specs=[
                pl.BlockSpec((KK, tm), lambda i: (0, i)),
                pl.BlockSpec((Cout, KK), lambda i: (0, 0)),
                pl.BlockSpec((Cout, 1), lambda i: (0, 0)),
            ],
            out_specs=pl.BlockSpec((Cout, tm), lambda i: (0, i)),
        ),
        compiler_params=_vmem_params(blk, ("parallel",)),
    )(patches_t, w_t, bias)


def conv_bn_lrelu(patches_t, w_t, gamma_beta, eps=1e-5):
    """Fused conv(no bias) + BatchNorm2d(batch stats) + LeakyReLU(0.2)."""
    KK, M = patches_t.shape
    Cout = w_t.shape[0]
    blk = KK * M * 2 + Cout * KK * 2 + Cout * 8 + Cout * M * 2 + Cout * M * 4
    return pl.pallas_call(
        functools.partial(_conv_bn_lrelu_kernel, eps=eps, inv_m=1.0 / M),
        out_shape=jax.ShapeDtypeStruct((Cout, M), jnp.bfloat16),
        grid_spec=pltpu.PrefetchScalarGridSpec(
            num_scalar_prefetch=0,
            grid=(1,),
            in_specs=[
                pl.BlockSpec((KK, M), lambda i: (0, 0)),
                pl.BlockSpec((Cout, KK), lambda i: (0, 0)),
                pl.BlockSpec((Cout, 2), lambda i: (0, 0)),
            ],
            out_specs=pl.BlockSpec((Cout, M), lambda i: (0, 0)),
        ),
        compiler_params=_vmem_params(blk, ("arbitrary",)),
    )(patches_t, w_t, gamma_beta)


def conv_tail(patches_t, w4_t, gamma_beta, w5_tiled, sel, b5, eps=1e-5):
    """Fused layer 4 (conv+BN+LeakyReLU) + layer 5 (conv Cout=1 + sigmoid)."""
    KK, M = patches_t.shape
    Cout = w4_t.shape[0]
    N = sel.shape[1]
    blk = (KK * M * 2 + Cout * KK * 2 + Cout * 8 + Cout * M * 4
           + M * N * 4 + 8 + N * 4 + Cout * M * 4)
    return pl.pallas_call(
        functools.partial(_conv_tail_kernel, eps=eps, inv_m=1.0 / M),
        out_shape=jax.ShapeDtypeStruct((1, N), jnp.float32),
        grid_spec=pltpu.PrefetchScalarGridSpec(
            num_scalar_prefetch=0,
            grid=(1,),
            in_specs=[
                pl.BlockSpec((KK, M), lambda i: (0, 0)),
                pl.BlockSpec((Cout, KK), lambda i: (0, 0)),
                pl.BlockSpec((Cout, 2), lambda i: (0, 0)),
                pl.BlockSpec((Cout, M), lambda i: (0, 0)),
                pl.BlockSpec((M, N), lambda i: (0, 0)),
                pl.BlockSpec((1, 1), lambda i: (0, 0)),
            ],
            out_specs=pl.BlockSpec((1, N), lambda i: (0, 0)),
        ),
        compiler_params=_vmem_params(blk, ("arbitrary",)),
    )(patches_t, w4_t, gamma_beta, w5_tiled, sel, b5)


# -----------------------------------------------------------------------------
# JAX glue: channel-major space-to-depth patches and weight rearrangement
# -----------------------------------------------------------------------------
def build_patches_cm(x_cnhw, pad):
    """x: (C, N, H, W) bf16 -> patches^T (16*C, N*Ho*Wo) for a 4x4/stride-2 conv.

    The 4x4/s2 conv becomes a 2x2/s1 conv over a space-to-depth input; the four
    (Di, Dj) taps are concatenated along the contraction axis so the kernel
    performs a single MXU dot of depth 16*C."""
    C, N, H, W = x_cnhw.shape
    if pad:
        x_cnhw = jnp.pad(x_cnhw, ((0, 0), (0, 0), (pad, pad), (pad, pad)))
    Hp, Wp = H + 2 * pad, W + 2 * pad
    assert Hp % 2 == 0 and Wp % 2 == 0
    Ha, Wa = Hp // 2, Wp // 2
    Ho, Wo = Ha - 1, Wa - 1
    x6 = x_cnhw.reshape(C, N, Ha, 2, Wa, 2)                  # (c, n, a, di, b, dj)
    s2d = jnp.transpose(x6, (3, 5, 0, 1, 2, 4))              # (di, dj, c, n, a, b)
    s2d = s2d.reshape(4 * C, N, Ha, Wa)
    # TODO(synk): these shifted windows are materialized by XLA (~4x patch HBM
    # bytes); in-kernel halo windowing needs reshapes Mosaic rejects.
    taps = [s2d[:, :, di:di + Ho, dj:dj + Wo]
            for di in range(2) for dj in range(2)]
    patches = jnp.concatenate(taps, axis=0)                  # (16C, N, Ho, Wo)
    return patches.reshape(16 * C, N * Ho * Wo), (N, Ho, Wo)


def rearrange_weight_cm(w_oikk, dtype=jnp.bfloat16):
    """PyTorch (Cout, Cin, 4, 4) weight -> (Cout, 16*Cin) matching build_patches_cm."""
    Cout, Cin, k, _ = w_oikk.shape
    assert k == 4
    w6 = w_oikk.reshape(Cout, Cin, 2, 2, 2, 2)               # (co, ci, Di, di, Dj, dj)
    w6 = jnp.transpose(w6, (0, 2, 4, 3, 5, 1))               # (co, Di, Dj, di, dj, ci)
    return w6.reshape(Cout, 16 * Cin).astype(dtype)


def init_params(key, channels_img, features_d):
    """Deterministic PyTorch-style (uniform +-1/sqrt(fan_in)) init."""
    specs = [
        # (Cout, Cin, k, has_bias, has_bn)
        (features_d, channels_img, 4, True, False),
        (features_d * 2, features_d, 4, False, True),
        (features_d * 4, features_d * 2, 4, False, True),
        (features_d * 8, features_d * 4, 4, False, True),
        (1, features_d * 8, 4, True, False),
    ]
    params = []
    for (cout, cin, k, has_bias, has_bn) in specs:
        key, kw, kb = jax.random.split(key, 3)
        bound = 1.0 / jnp.sqrt(cin * k * k)
        w = jax.random.uniform(kw, (cout, cin, k, k), jnp.float32, -bound, bound)
        b = (jax.random.uniform(kb, (cout,), jnp.float32, -bound, bound)
             if has_bias else jnp.zeros((cout,), jnp.float32))
        gamma = jnp.ones((cout,), jnp.float32) if has_bn else None
        beta = jnp.zeros((cout,), jnp.float32) if has_bn else None
        params.append(dict(w=w, b=b, gamma=gamma, beta=beta, has_bn=has_bn))
    return params


# -----------------------------------------------------------------------------
# Forward pass (matches the PyTorch nn.Sequential)
# -----------------------------------------------------------------------------
def discriminator_forward(x_nchw, params):
    # Cast to bf16 before any layout glue; keep activations channel-major
    # (C, N, H, W) so every Pallas output is lane-dense (last dim = N*H*W).
    x = jnp.transpose(x_nchw.astype(jnp.bfloat16), (1, 0, 2, 3))

    # Layer 1: Conv(4,2,1, bias) + LeakyReLU(0.2)
    p = params[0]
    pt, (N, Ho, Wo) = build_patches_cm(x, pad=1)
    y = conv_bias_lrelu(pt, rearrange_weight_cm(p["w"]),
                        p["b"].astype(jnp.float32).reshape(-1, 1))
    x = y.reshape(-1, N, Ho, Wo)

    # Layers 2-3: Conv(4,2,1) + BatchNorm2d(batch stats) + LeakyReLU(0.2)
    for p in params[1:3]:
        pt, (N, Ho, Wo) = build_patches_cm(x, pad=1)
        gb = jnp.stack([p["gamma"], p["beta"]], axis=1).astype(jnp.float32)
        y = conv_bn_lrelu(pt, rearrange_weight_cm(p["w"]), gb)
        x = y.reshape(-1, N, Ho, Wo)

    # Layers 4+5 fused: Conv+BN+LeakyReLU, then Conv(4,2,0, Cout=1)+Sigmoid as an
    # in-kernel epilogue (layer-4 activation never leaves VMEM).
    p4, p5 = params[3], params[4]
    pt, (N, Ho, Wo) = build_patches_cm(x, pad=1)
    assert (Ho, Wo) == (4, 4), "fused tail assumes the canonical 64x64 DCGAN input"
    gb = jnp.stack([p4["gamma"], p4["beta"]], axis=1).astype(jnp.float32)
    c5 = p5["w"].shape[1]
    w5_tiled = jnp.tile(p5["w"][0].reshape(c5, Ho * Wo), (1, N)).astype(jnp.float32)
    sel = (jnp.arange(N * Ho * Wo)[:, None] // (Ho * Wo)
           == jnp.arange(N)[None, :]).astype(jnp.float32)
    b5 = p5["b"].astype(jnp.float32).reshape(1, 1)
    out = conv_tail(pt, rearrange_weight_cm(p4["w"]), gb, w5_tiled, sel, b5)  # (1, N)
    return jnp.transpose(out).reshape(N, 1, 1, 1)             # NCHW: (N, 1, 1, 1)


if __name__ == "__main__":
    channels_img = 3
    features_d = 8
    batch = 2
    img = 64  # minimum spatial size consistent with the final 4x4/s2/p0 conv

    key = jax.random.PRNGKey(0)
    key, kx = jax.random.split(key)
    x = jax.random.normal(kx, (batch, channels_img, img, img), jnp.float32)

    params = init_params(key, channels_img, features_d)
    fwd = jax.jit(discriminator_forward)
    out = jax.block_until_ready(fwd(x, params))

    assert out.shape == (batch, 1, 1, 1), out.shape
    assert bool(jnp.all((out >= 0.0) & (out <= 1.0)))   # sigmoid range
    print("KERNEL_OK")
</pallas_src>

<mosaic_0001>
module attributes {stable_mosaic.version = 11 : i64} {
  func.func @_conv_bias_lrelu_kernel(%arg0: i32, %arg1: memref<48x512xbf16, #tpu.memory_space<vmem>>, %arg2: memref<8x48xbf16, #tpu.memory_space<vmem>>, %arg3: memref<8x1xf32, #tpu.memory_space<vmem>>, %arg4: memref<8x512xbf16, #tpu.memory_space<vmem>>) attributes {dimension_semantics = [#tpu.dimension_semantics<parallel>], iteration_bounds = array<i64: 4>, scalar_prefetch = 0 : i64, scratch_operands = 0 : i64, tpu.core_type = #tpu.core_type<tc>, window_params = [{transform_indices = @transform_0, window_bounds = array<i64: 48, 512>}, {pipeline_mode = #tpu.pipeline_mode<synchronous>, transform_indices = @transform_1, window_bounds = array<i64: 8, 48>}, {pipeline_mode = #tpu.pipeline_mode<synchronous>, transform_indices = @transform_2, window_bounds = array<i64: 8, 1>}, {transform_indices = @transform_3, window_bounds = array<i64: 8, 512>}]} {
    %c0 = arith.constant 0 : index
    %c0_0 = arith.constant 0 : index
    %0 = vector.load %arg2[%c0, %c0_0] : memref<8x48xbf16, #tpu.memory_space<vmem>>, vector<8x48xbf16>
    %c0_1 = arith.constant 0 : index
    %c0_2 = arith.constant 0 : index
    %1 = vector.load %arg1[%c0_1, %c0_2] : memref<48x512xbf16, #tpu.memory_space<vmem>>, vector<48x512xbf16>
    %cst = arith.constant dense<0.000000e+00> : vector<8x512xf32>
    %2 = tpu.matmul %0, %1, %cst {dimension_numbers = #tpu.dot_dimension_numbers<[1], [0], [0], [1], [0, 0, 1, 1], [], []>} : vector<8x48xbf16>, vector<48x512xbf16>, vector<8x512xf32> -> vector<8x512xf32>
    %c0_3 = arith.constant 0 : index
    %c0_4 = arith.constant 0 : index
    %3 = vector.load %arg3[%c0_3, %c0_4] : memref<8x1xf32, #tpu.memory_space<vmem>>, vector<8x1xf32>
    %4 = vector.broadcast %3 : vector<8x1xf32> to vector<8x512xf32>
    %5 = arith.addf %2, %4 : vector<8x512xf32>
    %cst_5 = arith.constant 0.000000e+00 : f32
    %6 = vector.broadcast %cst_5 : f32 to vector<8x512xf32>
    %7 = arith.cmpf oge, %5, %6 : vector<8x512xf32>
    %cst_6 = arith.constant 2.000000e-01 : f32
    %8 = vector.broadcast %cst_6 : f32 to vector<8x512xf32>
    %9 = arith.mulf %8, %5 : vector<8x512xf32>
    %10 = arith.select %7, %5, %9 : vector<8x512xi1>, vector<8x512xf32>
    %11 = arith.truncf %10 : vector<8x512xf32> to vector<8x512xbf16>
    %c0_7 = arith.constant 0 : index
    %c0_8 = arith.constant 0 : index
    %12 = vector.load %arg4[%c0_7, %c0_8] : memref<8x512xbf16, #tpu.memory_space<vmem>>, vector<8x512xbf16>
    tpu.vector_store %arg4[%c0_7, %c0_8], %11 {strides = array<i32>} : memref<8x512xbf16, #tpu.memory_space<vmem>>, vector<8x512xbf16>,
    return
  }
  func.func @transform_0(%arg0: i32) -> (i32, i32) {
    %c0_i32 = arith.constant 0 : i32
    %c0_i32_0 = arith.constant 0 : i32
    return %c0_i32, %arg0 : i32, i32
  }
  func.func @transform_1(%arg0: i32) -> (i32, i32) {
    %c0_i32 = arith.constant 0 : i32
    %c0_i32_0 = arith.constant 0 : i32
    %c0_i32_1 = arith.constant 0 : i32
    return %c0_i32, %c0_i32_0 : i32, i32
  }
  func.func @transform_2(%arg0: i32) -> (i32, i32) {
    %c0_i32 = arith.constant 0 : i32
    %c0_i32_0 = arith.constant 0 : i32
    %c0_i32_1 = arith.constant 0 : i32
    return %c0_i32, %c0_i32_0 : i32, i32
  }
  func.func @transform_3(%arg0: i32) -> (i32, i32) {
    %c0_i32 = arith.constant 0 : i32
    %c0_i32_0 = arith.constant 0 : i32
    return %c0_i32, %arg0 : i32, i32
  }
}

module attributes {stable_mosaic.version = 11 : i64} {
  func.func @_conv_bn_lrelu_kernel(%arg0: i32, %arg1: memref<128x512xbf16, #tpu.memory_space<vmem>>, %arg2: memref<16x128xbf16, #tpu.memory_space<vmem>>, %arg3: memref<16x2xf32, #tpu.memory_space<vmem>>, %arg4: memref<16x512xbf16, #tpu.memory_space<vmem>>) attributes {dimension_semantics = [#tpu.dimension_semantics<arbitrary>], iteration_bounds = array<i64: 1>, scalar_prefetch = 0 : i64, scratch_operands = 0 : i64, tpu.core_type = #tpu.core_type<tc>, window_params = [{pipeline_mode = #tpu.pipeline_mode<synchronous>, transform_indices = @transform_0, window_bounds = array<i64: 128, 512>}, {pipeline_mode = #tpu.pipeline_mode<synchronous>, transform_indices = @transform_1, window_bounds = array<i64: 16, 128>}, {pipeline_mode = #tpu.pipeline_mode<synchronous>, transform_indices = @transform_2, window_bounds = array<i64: 16, 2>}, {pipeline_mode = #tpu.pipeline_mode<synchronous>, transform_indices = @transform_3, window_bounds = array<i64: 16, 512>}]} {
    %c0 = arith.constant 0 : index
    %c0_0 = arith.constant 0 : index
    %0 = vector.load %arg2[%c0, %c0_0] : memref<16x128xbf16, #tpu.memory_space<vmem>>, vector<16x128xbf16>
    %c0_1 = arith.constant 0 : index
    %c0_2 = arith.constant 0 : index
    %1 = vector.load %arg1[%c0_1, %c0_2] : memref<128x512xbf16, #tpu.memory_space<vmem>>, vector<128x512xbf16>
    %cst = arith.constant dense<0.000000e+00> : vector<16x512xf32>
    %2 = tpu.matmul %0, %1, %cst {dimension_numbers = #tpu.dot_dimension_numbers<[1], [0], [0], [1], [0, 0, 1, 1], [], []>} : vector<16x128xbf16>, vector<128x512xbf16>, vector<16x512xf32> -> vector<16x512xf32>
    %cst_3 = arith.constant dense<0.000000e+00> : vector<16xf32>
    %3 = vector.multi_reduction <add>, %2, %cst_3 [1] : vector<16x512xf32> to vector<16xf32>
    %4 = vector.shape_cast %3 : vector<16xf32> to vector<16x1xf32>
    %cst_4 = arith.constant 0.001953125 : f32
    %5 = vector.broadcast %cst_4 : f32 to vector<16x1xf32>
    %6 = arith.mulf %4, %5 : vector<16x1xf32>
    %7 = vector.broadcast %6 : vector<16x1xf32> to vector<16x512xf32>
    %8 = arith.subf %2, %7 : vector<16x512xf32>
    %9 = arith.mulf %8, %8 : vector<16x512xf32>
    %cst_5 = arith.constant dense<0.000000e+00> : vector<16xf32>
    %10 = vector.multi_reduction <add>, %9, %cst_5 [1] : vector<16x512xf32> to vector<16xf32>
    %11 = vector.shape_cast %10 : vector<16xf32> to vector<16x1xf32>
    %cst_6 = arith.constant 0.001953125 : f32
    %12 = vector.broadcast %cst_6 : f32 to vector<16x1xf32>
    %13 = arith.mulf %11, %12 : vector<16x1xf32>
    %cst_7 = arith.constant 0.000000e+00 : f32
    %14 = vector.broadcast %cst_7 : f32 to vector<16x1xf32>
    %15 = arith.maximumf %13, %14 : vector<16x1xf32>
    %cst_8 = arith.constant 9.99999974E-6 : f32
    %16 = vector.broadcast %cst_8 : f32 to vector<16x1xf32>
    %17 = arith.addf %15, %16 : vector<16x1xf32>
    %18 = math.rsqrt %17 : vector<16x1xf32>
    %c0_9 = arith.constant 0 : index
    %c0_10 = arith.constant 0 : index
    %19 = vector.load %arg3[%c0_9, %c0_10] : memref<16x2xf32, #tpu.memory_space<vmem>>, vector<16x2xf32>
    %20 = vector.extract_strided_slice %19 {offsets = [0, 0], sizes = [16, 1], strides = [1, 1]} : vector<16x2xf32> to vector<16x1xf32>
    %21 = arith.mulf %20, %18 : vector<16x1xf32>
    %22 = vector.broadcast %21 : vector<16x1xf32> to vector<16x512xf32>
    %23 = arith.mulf %8, %22 : vector<16x512xf32>
    %24 = vector.extract_strided_slice %19 {offsets = [0, 1], sizes = [16, 1], strides = [1, 1]} : vector<16x2xf32> to vector<16x1xf32>
    %25 = vector.broadcast %24 : vector<16x1xf32> to vector<16x512xf32>
    %26 = arith.addf %23, %25 : vector<16x512xf32>
    %cst_11 = arith.constant 0.000000e+00 : f32
    %27 = vector.broadcast %cst_11 : f32 to vector<16x512xf32>
    %28 = arith.cmpf oge, %26, %27 : vector<16x512xf32>
    %cst_12 = arith.constant 2.000000e-01 : f32
    %29 = vector.broadcast %cst_12 : f32 to vector<16x512xf32>
    %30 = arith.mulf %29, %26 : vector<16x512xf32>
    %31 = arith.select %28, %26, %30 : vector<16x512xi1>, vector<16x512xf32>
    %32 = arith.truncf %31 : vector<16x512xf32> to vector<16x512xbf16>
    %c0_13 = arith.constant 0 : index
    %c0_14 = arith.constant 0 : index
    %33 = vector.load %arg4[%c0_13, %c0_14] : memref<16x512xbf16, #tpu.memory_space<vmem>>, vector<16x512xbf16>
    tpu.vector_store %arg4[%c0_13, %c0_14], %32 {strides = array<i32>} : memref<16x512xbf16, #tpu.memory_space<vmem>>, vector<16x512xbf16>,
    return
  }
  func.func @transform_0(%arg0: i32) -> (i32, i32) {
    %c0_i32 = arith.constant 0 : i32
    %c0_i32_0 = arith.constant 0 : i32
    %c0_i32_1 = arith.constant 0 : i32
    return %c0_i32, %c0_i32_0 : i32, i32
  }
  func.func @transform_1(%arg0: i32) -> (i32, i32) {
    %c0_i32 = arith.constant 0 : i32
    %c0_i32_0 = arith.constant 0 : i32
    %c0_i32_1 = arith.constant 0 : i32
    return %c0_i32, %c0_i32_0 : i32, i32
  }
  func.func @transform_2(%arg0: i32) -> (i32, i32) {
    %c0_i32 = arith.constant 0 : i32
    %c0_i32_0 = arith.constant 0 : i32
    %c0_i32_1 = arith.constant 0 : i32
    return %c0_i32, %c0_i32_0 : i32, i32
  }
  func.func @transform_3(%arg0: i32) -> (i32, i32) {
    %c0_i32 = arith.constant 0 : i32
    %c0_i32_0 = arith.constant 0 : i32
    %c0_i32_1 = arith.constant 0 : i32
    return %c0_i32, %c0_i32_0 : i32, i32
  }
}

module attributes {stable_mosaic.version = 11 : i64} {
  func.func @_conv_bn_lrelu_kernel(%arg0: i32, %arg1: memref<256x128xbf16, #tpu.memory_space<vmem>>, %arg2: memref<32x256xbf16, #tpu.memory_space<vmem>>, %arg3: memref<32x2xf32, #tpu.memory_space<vmem>>, %arg4: memref<32x128xbf16, #tpu.memory_space<vmem>>) attributes {dimension_semantics = [#tpu.dimension_semantics<arbitrary>], iteration_bounds = array<i64: 1>, scalar_prefetch = 0 : i64, scratch_operands = 0 : i64, tpu.core_type = #tpu.core_type<tc>, window_params = [{pipeline_mode = #tpu.pipeline_mode<synchronous>, transform_indices = @transform_0, window_bounds = array<i64: 256, 128>}, {pipeline_mode = #tpu.pipeline_mode<synchronous>, transform_indices = @transform_1, window_bounds = array<i64: 32, 256>}, {pipeline_mode = #tpu.pipeline_mode<synchronous>, transform_indices = @transform_2, window_bounds = array<i64: 32, 2>}, {pipeline_mode = #tpu.pipeline_mode<synchronous>, transform_indices = @transform_3, window_bounds = array<i64: 32, 128>}]} {
    %c0 = arith.constant 0 : index
    %c0_0 = arith.constant 0 : index
    %0 = vector.load %arg2[%c0, %c0_0] : memref<32x256xbf16, #tpu.memory_space<vmem>>, vector<32x256xbf16>
    %c0_1 = arith.constant 0 : index
    %c0_2 = arith.constant 0 : index
    %1 = vector.load %arg1[%c0_1, %c0_2] : memref<256x128xbf16, #tpu.memory_space<vmem>>, vector<256x128xbf16>
    %cst = arith.constant dense<0.000000e+00> : vector<32x128xf32>
    %2 = tpu.matmul %0, %1, %cst {dimension_numbers = #tpu.dot_dimension_numbers<[1], [0], [0], [1], [0, 0, 1, 1], [], []>} : vector<32x256xbf16>, vector<256x128xbf16>, vector<32x128xf32> -> vector<32x128xf32>
    %cst_3 = arith.constant dense<0.000000e+00> : vector<32xf32>
    %3 = vector.multi_reduction <add>, %2, %cst_3 [1] : vector<32x128xf32> to vector<32xf32>
    %4 = vector.shape_cast %3 : vector<32xf32> to vector<32x1xf32>
    %cst_4 = arith.constant 7.812500e-03 : f32
    %5 = vector.broadcast %cst_4 : f32 to vector<32x1xf32>
    %6 = arith.mulf %4, %5 : vector<32x1xf32>
    %7 = vector.broadcast %6 : vector<32x1xf32> to vector<32x128xf32>
    %8 = arith.subf %2, %7 : vector<32x128xf32>
    %9 = arith.mulf %8, %8 : vector<32x128xf32>
    %cst_5 = arith.constant dense<0.000000e+00> : vector<32xf32>
    %10 = vector.multi_reduction <add>, %9, %cst_5 [1] : vector<32x128xf32> to vector<32xf32>
    %11 = vector.shape_cast %10 : vector<32xf32> to vector<32x1xf32>
    %cst_6 = arith.constant 7.812500e-03 : f32
    %12 = vector.broadcast %cst_6 : f32 to vector<32x1xf32>
    %13 = arith.mulf %11, %12 : vector<32x1xf32>
    %cst_7 = arith.constant 0.000000e+00 : f32
    %14 = vector.broadcast %cst_7 : f32 to vector<32x1xf32>
    %15 = arith.maximumf %13, %14 : vector<32x1xf32>
    %cst_8 = arith.constant 9.99999974E-6 : f32
    %16 = vector.broadcast %cst_8 : f32 to vector<32x1xf32>
    %17 = arith.addf %15, %16 : vector<32x1xf32>
    %18 = math.rsqrt %17 : vector<32x1xf32>
    %c0_9 = arith.constant 0 : index
    %c0_10 = arith.constant 0 : index
    %19 = vector.load %arg3[%c0_9, %c0_10] : memref<32x2xf32, #tpu.memory_space<vmem>>, vector<32x2xf32>
    %20 = vector.extract_strided_slice %19 {offsets = [0, 0], sizes = [32, 1], strides = [1, 1]} : vector<32x2xf32> to vector<32x1xf32>
    %21 = arith.mulf %20, %18 : vector<32x1xf32>
    %22 = vector.broadcast %21 : vector<32x1xf32> to vector<32x128xf32>
    %23 = arith.mulf %8, %22 : vector<32x128xf32>
    %24 = vector.extract_strided_slice %19 {offsets = [0, 1], sizes = [32, 1], strides = [1, 1]} : vector<32x2xf32> to vector<32x1xf32>
    %25 = vector.broadcast %24 : vector<32x1xf32> to vector<32x128xf32>
    %26 = arith.addf %23, %25 : vector<32x128xf32>
    %cst_11 = arith.constant 0.000000e+00 : f32
    %27 = vector.broadcast %cst_11 : f32 to vector<32x128xf32>
    %28 = arith.cmpf oge, %26, %27 : vector<32x128xf32>
    %cst_12 = arith.constant 2.000000e-01 : f32
    %29 = vector.broadcast %cst_12 : f32 to vector<32x128xf32>
    %30 = arith.mulf %29, %26 : vector<32x128xf32>
    %31 = arith.select %28, %26, %30 : vector<32x128xi1>, vector<32x128xf32>
    %32 = arith.truncf %31 : vector<32x128xf32> to vector<32x128xbf16>
    %c0_13 = arith.constant 0 : index
    %c0_14 = arith.constant 0 : index
    %33 = vector.load %arg4[%c0_13, %c0_14] : memref<32x128xbf16, #tpu.memory_space<vmem>>, vector<32x128xbf16>
    tpu.vector_store %arg4[%c0_13, %c0_14], %32 {strides = array<i32>} : memref<32x128xbf16, #tpu.memory_space<vmem>>, vector<32x128xbf16>,
    return
  }
  func.func @transform_0(%arg0: i32) -> (i32, i32) {
    %c0_i32 = arith.constant 0 : i32
    %c0_i32_0 = arith.constant 0 : i32
    %c0_i32_1 = arith.constant 0 : i32
    return %c0_i32, %c0_i32_0 : i32, i32
  }
  func.func @transform_1(%arg0: i32) -> (i32, i32) {
    %c0_i32 = arith.constant 0 : i32
    %c0_i32_0 = arith.constant 0 : i32
    %c0_i32_1 = arith.constant 0 : i32
    return %c0_i32, %c0_i32_0 : i32, i32
  }
  func.func @transform_2(%arg0: i32) -> (i32, i32) {
    %c0_i32 = arith.constant 0 : i32
    %c0_i32_0 = arith.constant 0 : i32
    %c0_i32_1 = arith.constant 0 : i32
    return %c0_i32, %c0_i32_0 : i32, i32
  }
  func.func @transform_3(%arg0: i32) -> (i32, i32) {
    %c0_i32 = arith.constant 0 : i32
    %c0_i32_0 = arith.constant 0 : i32
    %c0_i32_1 = arith.constant 0 : i32
    return %c0_i32, %c0_i32_0 : i32, i32
  }
}

module attributes {stable_mosaic.version = 11 : i64} {
  func.func @_conv_tail_kernel(%arg0: i32, %arg1: memref<512x32xbf16, #tpu.memory_space<vmem>>, %arg2: memref<64x512xbf16, #tpu.memory_space<vmem>>, %arg3: memref<64x2xf32, #tpu.memory_space<vmem>>, %arg4: memref<64x32xf32, #tpu.memory_space<vmem>>, %arg5: memref<32x2xf32, #tpu.memory_space<vmem>>, %arg6: memref<1x1xf32, #tpu.memory_space<vmem>>, %arg7: memref<1x2xf32, #tpu.memory_space<vmem>>) attributes {dimension_semantics = [#tpu.dimension_semantics<arbitrary>], iteration_bounds = array<i64: 1>, scalar_prefetch = 0 : i64, scratch_operands = 0 : i64, tpu.core_type = #tpu.core_type<tc>, window_params = [{pipeline_mode = #tpu.pipeline_mode<synchronous>, transform_indices = @transform_0, window_bounds = array<i64: 512, 32>}, {pipeline_mode = #tpu.pipeline_mode<synchronous>, transform_indices = @transform_1, window_bounds = array<i64: 64, 512>}, {pipeline_mode = #tpu.pipeline_mode<synchronous>, transform_indices = @transform_2, window_bounds = array<i64: 64, 2>}, {pipeline_mode = #tpu.pipeline_mode<synchronous>, transform_indices = @transform_3, window_bounds = array<i64: 64, 32>}, {pipeline_mode = #tpu.pipeline_mode<synchronous>, transform_indices = @transform_4, window_bounds = array<i64: 32, 2>}, {pipeline_mode = #tpu.pipeline_mode<synchronous>, transform_indices = @transform_5, window_bounds = array<i64: 1, 1>}, {pipeline_mode = #tpu.pipeline_mode<synchronous>, transform_indices = @transform_6, window_bounds = array<i64: 1, 2>}]} {
    %c0 = arith.constant 0 : index
    %c0_0 = arith.constant 0 : index
    %0 = vector.load %arg2[%c0, %c0_0] : memref<64x512xbf16, #tpu.memory_space<vmem>>, vector<64x512xbf16>
    %c0_1 = arith.constant 0 : index
    %c0_2 = arith.constant 0 : index
    %1 = vector.load %arg1[%c0_1, %c0_2] : memref<512x32xbf16, #tpu.memory_space<vmem>>, vector<512x32xbf16>
    %cst = arith.constant dense<0.000000e+00> : vector<64x32xf32>
    %2 = tpu.matmul %0, %1, %cst {dimension_numbers = #tpu.dot_dimension_numbers<[1], [0], [0], [1], [0, 0, 1, 1], [], []>} : vector<64x512xbf16>, vector<512x32xbf16>, vector<64x32xf32> -> vector<64x32xf32>
    %cst_3 = arith.constant dense<0.000000e+00> : vector<64xf32>
    %3 = vector.multi_reduction <add>, %2, %cst_3 [1] : vector<64x32xf32> to vector<64xf32>
    %4 = vector.shape_cast %3 : vector<64xf32> to vector<64x1xf32>
    %cst_4 = arith.constant 3.125000e-02 : f32
    %5 = vector.broadcast %cst_4 : f32 to vector<64x1xf32>
    %6 = arith.mulf %4, %5 : vector<64x1xf32>
    %7 = vector.broadcast %6 : vector<64x1xf32> to vector<64x32xf32>
    %8 = arith.subf %2, %7 : vector<64x32xf32>
    %9 = arith.mulf %8, %8 : vector<64x32xf32>
    %cst_5 = arith.constant dense<0.000000e+00> : vector<64xf32>
    %10 = vector.multi_reduction <add>, %9, %cst_5 [1] : vector<64x32xf32> to vector<64xf32>
    %11 = vector.shape_cast %10 : vector<64xf32> to vector<64x1xf32>
    %cst_6 = arith.constant 3.125000e-02 : f32
    %12 = vector.broadcast %cst_6 : f32 to vector<64x1xf32>
    %13 = arith.mulf %11, %12 : vector<64x1xf32>
    %cst_7 = arith.constant 0.000000e+00 : f32
    %14 = vector.broadcast %cst_7 : f32 to vector<64x1xf32>
    %15 = arith.maximumf %13, %14 : vector<64x1xf32>
    %cst_8 = arith.constant 9.99999974E-6 : f32
    %16 = vector.broadcast %cst_8 : f32 to vector<64x1xf32>
    %17 = arith.addf %15, %16 : vector<64x1xf32>
    %18 = math.rsqrt %17 : vector<64x1xf32>
    %c0_9 = arith.constant 0 : index
    %c0_10 = arith.constant 0 : index
    %19 = vector.load %arg3[%c0_9, %c0_10] : memref<64x2xf32, #tpu.memory_space<vmem>>, vector<64x2xf32>
    %20 = vector.extract_strided_slice %19 {offsets = [0, 0], sizes = [64, 1], strides = [1, 1]} : vector<64x2xf32> to vector<64x1xf32>
    %21 = arith.mulf %20, %18 : vector<64x1xf32>
    %22 = vector.broadcast %21 : vector<64x1xf32> to vector<64x32xf32>
    %23 = arith.mulf %8, %22 : vector<64x32xf32>
    %24 = vector.extract_strided_slice %19 {offsets = [0, 1], sizes = [64, 1], strides = [1, 1]} : vector<64x2xf32> to vector<64x1xf32>
    %25 = vector.broadcast %24 : vector<64x1xf32> to vector<64x32xf32>
    %26 = arith.addf %23, %25 : vector<64x32xf32>
    %cst_11 = arith.constant 0.000000e+00 : f32
    %27 = vector.broadcast %cst_11 : f32 to vector<64x32xf32>
    %28 = arith.cmpf oge, %26, %27 : vector<64x32xf32>
    %cst_12 = arith.constant 2.000000e-01 : f32
    %29 = vector.broadcast %cst_12 : f32 to vector<64x32xf32>
    %30 = arith.mulf %29, %26 : vector<64x32xf32>
    %31 = arith.select %28, %26, %30 : vector<64x32xi1>, vector<64x32xf32>
    %c0_13 = arith.constant 0 : index
    %c0_14 = arith.constant 0 : index
    %32 = vector.load %arg4[%c0_13, %c0_14] : memref<64x32xf32, #tpu.memory_space<vmem>>, vector<64x32xf32>
    %33 = arith.mulf %31, %32 : vector<64x32xf32>
    %c0_15 = arith.constant 0 : index
    %c0_16 = arith.constant 0 : index
    %34 = vector.load %arg5[%c0_15, %c0_16] : memref<32x2xf32, #tpu.memory_space<vmem>>, vector<32x2xf32>
    %cst_17 = arith.constant dense<0.000000e+00> : vector<64x2xf32>
    %35 = tpu.matmul %33, %34, %cst_17 {dimension_numbers = #tpu.dot_dimension_numbers<[1], [0], [0], [1], [0, 0, 1, 1], [], []>} : vector<64x32xf32>, vector<32x2xf32>, vector<64x2xf32> -> vector<64x2xf32>
    %cst_18 = arith.constant dense<0.000000e+00> : vector<2xf32>
    %36 = vector.multi_reduction <add>, %35, %cst_18 [0] : vector<64x2xf32> to vector<2xf32>
    %37 = vector.shape_cast %36 : vector<2xf32> to vector<1x2xf32>
    %c0_19 = arith.constant 0 : index
    %c0_20 = arith.constant 0 : index
    %38 = vector.load %arg6[%c0_19, %c0_20] : memref<1x1xf32, #tpu.memory_space<vmem>>, vector<1x1xf32>
    %39 = vector.broadcast %38 : vector<1x1xf32> to vector<1x2xf32>
    %40 = arith.addf %37, %39 : vector<1x2xf32>
    %41 = arith.negf %40 : vector<1x2xf32>
    %42 = math.exp %41 : vector<1x2xf32>
    %cst_21 = arith.constant 1.000000e+00 : f32
    %43 = vector.broadcast %cst_21 : f32 to vector<1x2xf32>
    %44 = arith.addf %43, %42 : vector<1x2xf32>
    %45 = arith.divf %43, %44 : vector<1x2xf32>
    %c0_22 = arith.constant 0 : index
    %c0_23 = arith.constant 0 : index
    %46 = vector.load %arg7[%c0_22, %c0_23] : memref<1x2xf32, #tpu.memory_space<vmem>>, vector<1x2xf32>
    tpu.vector_store %arg7[%c0_22, %c0_23], %45 {strides = array<i32>} : memref<1x2xf32, #tpu.memory_space<vmem>>, vector<1x2xf32>,
    return
  }
  func.func @transform_0(%arg0: i32) -> (i32, i32) {
    %c0_i32 = arith.constant 0 : i32
    %c0_i32_0 = arith.constant 0 : i32
    %c0_i32_1 = arith.constant 0 : i32
    return %c0_i32, %c0_i32_0 : i32, i32
  }
  func.func @transform_1(%arg0: i32) -> (i32, i32) {
    %c0_i32 = arith.constant 0 : i32
    %c0_i32_0 = arith.constant 0 : i32
    %c0_i32_1 = arith.constant 0 : i32
    return %c0_i32, %c0_i32_0 : i32, i32
  }
  func.func @transform_2(%arg0: i32) -> (i32, i32) {
    %c0_i32 = arith.constant 0 : i32
    %c0_i32_0 = arith.constant 0 : i32
    %c0_i32_1 = arith.constant 0 : i32
    return %c0_i32, %c0_i32_0 : i32, i32
  }
  func.func @transform_3(%arg0: i32) -> (i32, i32) {
    %c0_i32 = arith.constant 0 : i32
    %c0_i32_0 = arith.constant 0 : i32
    %c0_i32_1 = arith.constant 0 : i32
    return %c0_i32, %c0_i32_0 : i32, i32
  }
  func.func @transform_4(%arg0: i32) -> (i32, i32) {
    %c0_i32 = arith.constant 0 : i32
    %c0_i32_0 = arith.constant 0 : i32
    %c0_i32_1 = arith.constant 0 : i32
    return %c0_i32, %c0_i32_0 : i32, i32
  }
  func.func @transform_5(%arg0: i32) -> (i32, i32) {
    %c0_i32 = arith.constant 0 : i32
    %c0_i32_0 = arith.constant 0 : i32
    %c0_i32_1 = arith.constant 0 : i32
    return %c0_i32, %c0_i32_0 : i32, i32
  }
  func.func @transform_6(%arg0: i32) -> (i32, i32) {
    %c0_i32 = arith.constant 0 : i32
    %c0_i32_0 = arith.constant 0 : i32
    %c0_i32_1 = arith.constant 0 : i32
    return %c0_i32, %c0_i32_0 : i32, i32
  }
}

</mosaic_0001>

<llo_original>
// kernel: discriminator_forward.4
$region0: #{discriminator_forward.4}
  #allocation0 [shape = 'u32[]', space=smem, size = 0x4, offset = 0x4, fixed_abs, tag = 'smem constant byte address 0x4 - core index']
  #allocation1 [shape = 'u32[144,128]{1,0:T(1,128)}', space=vmem, size = 0x12000, scoped, tag = 'internal scratch']
  %s0 = inlined_call_operand.vmem [shape: bf16[48,2048], index: 0, kind: input, shape index: {}]
  %s1 = inlined_call_operand.vmem [shape: bf16[8,48], index: 1, kind: input, shape index: {}]
  %s2 = inlined_call_operand.vmem [shape: f32[8,1], index: 2, kind: input, shape index: {}]
  %s3 = inlined_call_operand.vmem [shape: bf16[8,2048], index: 3, kind: output, shape index: {}]
  %s4 = sld [smem:[#allocation0]]
  $region68: #{discriminator_forward.4} parent=0
    _
  %s6 = ssub.s32 1, %s4
  %s7 = scalar_select 0, %s6, %s4
  $region1: #{discriminator_forward.4} parent=0
    #allocation2 [shape = 'u8[98304]{0}', space=vmem, size = 0x18000, scoped, tag = 'input window, operand 0']
    loop: start=0, step=1, limit=6
    $region2: #{discriminator_forward.4} parent=1 // loop_pre_header
      _
    $region3: #{discriminator_forward.4} parent=1 // loop_header
      %s9 = sphi 0, %s13
      %p10 = scmp.ge.s32.totalorder %s9, 6
      %s19 = sphi 0, %s21
      %s22 = sphi 0, %s19
      %s23 = sphi 0, %s22
      %s39 = sphi 0, %s23
      %s43 = sphi 0, %s43
      %s45 = sphi 0, %s43
      %s46 = sphi 0, %s45
      %s60 = sphi 0, %s46
      %s64 = sphi 0, %s64
      %s66 = sphi 0, %s64
      %s67 = sphi 0, %s66
      %s81 = sphi 0, %s67
      %s87 = sphi 0, %s89
      %s90 = sphi 0, %s87
      %s91 = sphi 0, %s90
      %s107 = sphi 0, %s91
    $region4: #{discriminator_forward.4} parent=1 // loop_header_branch
      %12 = sbr.rel (%p10) target = $region8
    $region5: #{discriminator_forward.4} parent=1 // loop_body
      %s14 = ssub.s32 %s9, 1
      %s15 = ssub.s32 %s9, 2
      %s16 = sadd.s32 %s9, 1
      %s17 = ssub.s32 %s9, %s16
      %p18 = scmp.eq.s32.totalorder %s17, 0
      %s20 = sadd.s32 %s19, 1
      %s21 = scalar_select %p18, %s19, %s20
      %p24 = pneg %p18
      %p25 = scmp.eq.s32.totalorder %s9, 3
      %p26 = por %p24, %p25
      %p27 = scmp.ne.s32.totalorder %s19, %s22
      %p28 = scmp.eq.s32.totalorder %s9, 0
      %p29 = por %p27, %p28
      %p30 = scmp.ne.s32.totalorder %s19, %s22
      %p31 = scmp.eq.s32.totalorder %s14, 3
      %p32 = por %p30, %p31
      %p33 = scmp.ne.s32.totalorder %s22, %s23
      %p34 = scmp.eq.s32.totalorder %s14, 0
      %p35 = por %p33, %p34
      %p36 = scmp.ne.s32.totalorder %s22, %s23
      %p37 = scmp.eq.s32.totalorder %s15, 3
      %p38 = por %p36, %p37
      %p40 = scmp.ne.s32.totalorder %s23, %s39
      %p41 = scmp.eq.s32.totalorder %s15, 0
      %p42 = por %p40, %p41
      %s44 = sadd.s32 %s43, 1
      %p47 = scmp.eq.s32.totalorder %s9, 3
      %p48 = scmp.ne.s32.totalorder %s43, %s45
      %p49 = scmp.eq.s32.totalorder %s9, 0
      %p50 = por %p48, %p49
      %p51 = scmp.ne.s32.totalorder %s43, %s45
      %p52 = scmp.eq.s32.totalorder %s14, 3
      %p53 = por %p51, %p52
      %p54 = scmp.ne.s32.totalorder %s45, %s46
      %p55 = scmp.eq.s32.totalorder %s14, 0
      %p56 = por %p54, %p55
      %p57 = scmp.ne.s32.totalorder %s45, %s46
      %p58 = scmp.eq.s32.totalorder %s15, 3
      %p59 = por %p57, %p58
      %p61 = scmp.ne.s32.totalorder %s46, %s60
      %p62 = scmp.eq.s32.totalorder %s15, 0
      %p63 = por %p61, %p62
      %s65 = sadd.s32 %s64, 1
      %p68 = scmp.eq.s32.totalorder %s9, 3
      %p69 = scmp.ne.s32.totalorder %s64, %s66
      %p70 = scmp.eq.s32.totalorder %s9, 0
      %p71 = por %p69, %p70
      %p72 = scmp.ne.s32.totalorder %s64, %s66
      %p73 = scmp.eq.s32.totalorder %s14, 3
      %p74 = por %p72, %p73
      %p75 = scmp.ne.s32.totalorder %s66, %s67
      %p76 = scmp.eq.s32.totalorder %s14, 0
      %p77 = por %p75, %p76
      %p78 = scmp.ne.s32.totalorder %s66, %s67
      %p79 = scmp.eq.s32.totalorder %s15, 3
      %p80 = por %p78, %p79
      %p82 = scmp.ne.s32.totalorder %s67, %s81
      %p83 = scmp.eq.s32.totalorder %s15, 0
      %p84 = por %p82, %p83
      %s85 = ssub.s32 %s9, %s16
      %p86 = scmp.eq.s32.totalorder %s85, 0
      %s88 = sadd.s32 %s87, 1
      %s89 = scalar_select %p86, %s87, %s88
      %p92 = pneg %p86
      %p93 = scmp.eq.s32.totalorder %s9, 3
      %p94 = por %p92, %p93
      %p95 = scmp.ne.s32.totalorder %s87, %s90
      %p96 = scmp.eq.s32.totalorder %s9, 0
      %p97 = por %p95, %p96
      %p98 = scmp.ne.s32.totalorder %s87, %s90
      %p99 = scmp.eq.s32.totalorder %s14, 3
      %p100 = por %p98, %p99
      %p101 = scmp.ne.s32.totalorder %s90, %s91
      %p102 = scmp.eq.s32.totalorder %s14, 0
      %p103 = por %p101, %p102
      %p104 = scmp.ne.s32.totalorder %s90, %s91
      %p105 = scmp.eq.s32.totalorder %s15, 3
      %p106 = por %p104, %p105
      %p108 = scmp.ne.s32.totalorder %s91, %s107
      %p109 = scmp.eq.s32.totalorder %s15, 0
      %p110 = por %p108, %p109
      %p111 = scmp.le.s32.totalorder 1, %s9
      %p112 = scmp.lt.s32.totalorder %s9, 5
      %p113 = pnand %p111, %p112
      %p114 = pneg %p113
      // Predicated region
      $region9: #{discriminator_forward.4} parent=5 // pred_check
        _
      $region10: #{discriminator_forward.4} parent=5 // pred_check_branch
        %116 = sbr.rel (%p113) target = $region12
      $region11: #{discriminator_forward.4} parent=5 // pred_region
        %s117 = ssub.s32 %s9, 1
        // Predicated region
        $region13: #{discriminator_forward.4} parent=11 // pred_check
          %p118 = pneg %p56
        $region14: #{discriminator_forward.4} parent=11 // pred_check_branch
          %120 = sbr.rel (%p118) target = $region16
        $region15: #{discriminator_forward.4} parent=11 // pred_region
          _
        $region16: #{discriminator_forward.4} parent=11 // pred_fallthru
          _
        // Predicated region
        $region17: #{discriminator_forward.4} parent=11 // pred_check
          %p121 = pneg %p77
        $region18: #{discriminator_forward.4} parent=11 // pred_check_branch
          %123 = sbr.rel (%p121) target = $region20
        $region19: #{discriminator_forward.4} parent=11 // pred_region
          _
        $region20: #{discriminator_forward.4} parent=11 // pred_fallthru
          _
      $region12: #{discriminator_forward.4} parent=5 // pred_fallthru
        _
      %p124 = scmp.lt.s32.totalorder %s9, 4
      // Predicated region
      $region21: #{discriminator_forward.4} parent=5 // pred_check
        %p125 = pneg %p124
      $region22: #{discriminator_forward.4} parent=5 // pred_check_branch
        %127 = sbr.rel (%p125) target = $region24
      $region23: #{discriminator_forward.4} parent=5 // pred_region
        // Predicated region
        $region25: #{discriminator_forward.4} parent=23 // pred_check
          %p128 = pneg %p29
        $region26: #{discriminator_forward.4} parent=23 // pred_check_branch
          %130 = sbr.rel (%p128) target = $region28
        $region27: #{discriminator_forward.4} parent=23 // pred_region
          %s131 = sand.u32 %s19, 1
          %s132 = sand.u32 %s19, 1
          %s133 = smul.addr %s132, 96
          %s134 = scalar_lea.vmem [#allocation2], %s133
          %s135 = smul.u32 4, %s9
          %s136 = smul.addr %s135, 4
          %s137 = scalar_lea.vmem %s0, %s136
          // Predicated region
          $region29: #{discriminator_forward.4} parent=27 // pred_check
            _
          $region30: #{discriminator_forward.4} parent=27 // pred_check_branch
            %139 = sbr.rel (0) target = $region32
          $region31: #{discriminator_forward.4} parent=27 // pred_region
            // Predicated region
            $region33: #{discriminator_forward.4} parent=31 // pred_check
              _
            $region34: #{discriminator_forward.4} parent=31 // pred_check_branch
              %141 = sbr.rel (0) target = $region36
            $region35: #{discriminator_forward.4} parent=31 // pred_region
              loop: start=0, step=1, limit=1
              $region37: #{discriminator_forward.4} parent=35 // loop_pre_header
                _
              $region38: #{discriminator_forward.4} parent=35 // loop_header
                %s143 = sphi 0, %s147
                %p144 = scmp.ge.s32.totalorder %s143, 1
                %s148 = sphi %s137, %s137
                %s149 = sphi %s134, %s134
              $region39: #{discriminator_forward.4} parent=35 // loop_header_branch
                %146 = sbr.rel (%p144) target = $region43
              $region40: #{discriminator_forward.4} parent=35 // loop_body
                %v150 = vld [vmem:[%s148] sm:$0xff]
                %151 = vst [vmem:[%s149] sm:$0xff] %v150
                %v152 = vld [vmem:[%s148 + $0x8] sm:$0xff]
                %153 = vst [vmem:[%s149 + $0x8] sm:$0xff] %v152
                %v154 = vld [vmem:[%s148 + $0x40] sm:$0xff]
                %155 = vst [vmem:[%s149 + $0x10] sm:$0xff] %v154
                %v156 = vld [vmem:[%s148 + $0x48] sm:$0xff]
                %157 = vst [vmem:[%s149 + $0x18] sm:$0xff] %v156
                %v158 = vld [vmem:[%s148 + $0x80] sm:$0xff]
                %159 = vst [vmem:[%s149 + $0x20] sm:$0xff] %v158
                %v160 = vld [vmem:[%s148 + $0x88] sm:$0xff]
                %161 = vst [vmem:[%s149 + $0x28] sm:$0xff] %v160
                %v162 = vld [vmem:[%s148 + $0xc0] sm:$0xff]
                %163 = vst [vmem:[%s149 + $0x30] sm:$0xff] %v162
                %v164 = vld [vmem:[%s148 + $0xc8] sm:$0xff]
                %165 = vst [vmem:[%s149 + $0x38] sm:$0xff] %v164
                %v166 = vld [vmem:[%s148 + $0x100] sm:$0xff]
                %167 = vst [vmem:[%s149 + $0x40] sm:$0xff] %v166
                %v168 = vld [vmem:[%s148 + $0x108] sm:$0xff]
                %169 = vst [vmem:[%s149 + $0x48] sm:$0xff] %v168
                %v170 = vld [vmem:[%s148 + $0x140] sm:$0xff]
                %171 = vst [vmem:[%s149 + $0x50] sm:$0xff] %v170
                %v172 = vld [vmem:[%s148 + $0x148] sm:$0xff]
                %173 = vst [vmem:[%s149 + $0x58] sm:$0xff] %v172
              $region41: #{discriminator_forward.4} parent=35 // loop_footer
                %s147 = sadd.s32 1, %s143
              $region42: #{discriminator_forward.4} parent=35 // loop_footer_branch
                %142 = sbr.rel target = $region38
              $region43: #{discriminator_forward.4} parent=35 // loop_exit
                _
            $region36: #{discriminator_forward.4} parent=31 // pred_fallthru
              _
            // Predicated region
            $region44: #{discriminator_forward.4} parent=31 // pred_check
              _
            $region45: #{discriminator_forward.4} parent=31 // pred_check_branch
              %175 = sbr.rel target = $region47
            $region46: #{discriminator_forward.4} parent=31 // pred_region
              _
            $region47: #{discriminator_forward.4} parent=31 // pred_fallthru
              _
          $region32: #{discriminator_forward.4} parent=27 // pred_fallthru
            _
          %176 = vnop
        $region28: #{discriminator_forward.4} parent=23 // pred_fallthru
          _
      $region24: #{discriminator_forward.4} parent=5 // pred_fallthru
        _
      %p177 = scmp.le.s32.totalorder 1, %s9
      %p178 = scmp.lt.s32.totalorder %s9, 5
      %p179 = pnand %p177, %p178
      %p180 = pneg %p179
      // Predicated region
      $region48: #{discriminator_forward.4} parent=5 // pred_check
        _
      $region49: #{discriminator_forward.4} parent=5 // pred_check_branch
        %182 = sbr.rel (%p179) target = $region51
      $region50: #{discriminator_forward.4} parent=5 // pred_region
        %s183 = ssub.s32 %s9, 1
        %s184 = sand.u32 %s22, 1
        %s185 = sand.u32 %s22, 1
        %s186 = smul.addr %s185, 96
        %s187 = scalar_lea.vmem [#allocation2], %s186
        // Predicated region
        $region52: #{discriminator_forward.4} parent=50 // pred_check
          %p188 = pneg %p35
        $region53: #{discriminator_forward.4} parent=50 // pred_check_branch
          %190 = sbr.rel (%p188) target = $region55
        $region54: #{discriminator_forward.4} parent=50 // pred_region
          _
        $region55: #{discriminator_forward.4} parent=50 // pred_fallthru
          _
        %s191 = sand.u32 %s22, 1
        %s192 = sand.u32 %s22, 1
        %s193 = smul.addr %s192, 96
        %s194 = scalar_lea.vmem [#allocation2], %s193
        %p195 = pneg %p35
        %p196 = pneg %p32
        %p197 = pneg %p56
        %p198 = pneg %p53
        %p199 = pneg %p77
        %p200 = pneg %p74
        %p201 = pneg %p103
        %p202 = pneg %p100
        %s203 = smul.u32 4, %s14
        %p204 = scmp.lt.s32.totalorder %s203, 15
        %s205 = scalar_select %p204, %s203, 15
        %s206 = smul.addr %s205, 4
        %s207 = scalar_lea.vmem %s3, %s206
        %s208 = smul.u32 4, %s14
        %s209 = smul.u32 4, %s14
        %p210 = scmp.lt.s32.totalorder %s209, 15
        %s211 = scalar_select %p210, %s209, 15
        %s212 = smul.addr %s211, 4
        %s213 = scalar_lea.vmem %s3, %s212
        %s214 = smul.u32 4, %s14
        %v216 = vld [vmem:[%s1] sm:$0xf]
        %v217 = vld [vmem:[%s187] sm:$0xff]
        %v218 = vld [vmem:[%s187 + $0x8] sm:$0xff]
        %v219 = vld [vmem:[%s187 + $0x10] sm:$0xff]
        %v220 = vld [vmem:[%s187 + $0x18] sm:$0xff]
        %v221 = vld [vmem:[%s187 + $0x20] sm:$0xff]
        %v222 = vld [vmem:[%s187 + $0x28] sm:$0xff]
        %v223 = vld [vmem:[%s187 + $0x30] sm:$0xff]
        %v224 = vld [vmem:[%s187 + $0x38] sm:$0xff]
        %v225 = vld [vmem:[%s187 + $0x40] sm:$0xff]
        %v226 = vld [vmem:[%s187 + $0x48] sm:$0xff]
        %v227 = vld [vmem:[%s187 + $0x50] sm:$0xff]
        %v228 = vld [vmem:[%s187 + $0x58] sm:$0xff]
        %v229 = vld [vmem:[%s2] sm:$0xff]
        %231 = vset.pattern.permute.xlu0 0
        %232 = vperm.xlu0 %231, %v229
        %v233 = vpop.permute.xlu0 %232
        %v247 = vunpack.c.l.b16 %v217
        %v248 = vunpack.c.h.b16 %v217
        %v249 = vunpack.c.l.b16 %v218
        %v250 = vunpack.c.h.b16 %v218
        %v251 = vunpack.c.l.b16 %v219
        %v252 = vunpack.c.h.b16 %v219
        %v253 = vunpack.c.l.b16 %v220
        %v254 = vunpack.c.h.b16 %v220
        %v255 = vunpack.c.l.b16 %v221
        %v256 = vunpack.c.h.b16 %v221
        %v257 = vunpack.c.l.b16 %v222
        %v258 = vunpack.c.h.b16 %v222
        %v259 = vunpack.c.l.b16 %v223
        %v260 = vunpack.c.h.b16 %v223
        %v261 = vunpack.c.l.b16 %v224
        %v262 = vunpack.c.h.b16 %v224
        %v263 = vunpack.c.l.b16 %v225
        %v264 = vunpack.c.h.b16 %v225
        %v265 = vunpack.c.l.b16 %v226
        %v266 = vunpack.c.h.b16 %v226
        %v267 = vunpack.c.l.b16 %v227
        %v268 = vunpack.c.h.b16 %v227
        %v269 = vunpack.c.l.b16 %v228
        %v270 = vunpack.c.h.b16 %v228
        %v271 = vpack.c.b16 %v251, %v247
        %v272 = vpack.c.b16 %v252, %v248
        %v273 = vpack.c.b16 %v253, %v249
        %v274 = vpack.c.b16 %v254, %v250
        %v275 = vpack.c.b16 %v259, %v255
        %v276 = vpack.c.b16 %v260, %v256
        %v277 = vpack.c.b16 %v261, %v257
        %v278 = vpack.c.b16 %v262, %v258
        %v279 = vpack.c.b16 %v267, %v263
        %v280 = vpack.c.b16 %v268, %v264
        %v281 = vpack.c.b16 %v269, %v265
        %v282 = vpack.c.b16 %v270, %v266
        %vm295 = vcmask 392192
        %v297 = vsel %vm295, %v216, 0
        %299 = vmatprep.subr.bf16.mxu0 %v272
        %300 = vmatpush1.bf16.msra.mxu0 %v271
        %301 = vmatprep.subr.bf16.mxu0 %v276
        %302 = vmatpush1.bf16.msra.mxu0 %v275
        %303 = vmatprep.subr.bf16.mxu0 %v280
        %304 = vmatpush1.bf16.msra.mxu0 %v279
        %305 = vmatprep.subr.bf16.mxu0 0
        %306 = vmatpush1.bf16.msra.mxu0 0
        %307 = vmatprep.subr.bf16.mxu0 0
        %308 = vmatpush1.bf16.msra.mxu0 0
        %309 = vmatprep.subr.bf16.mxu0 0
        %310 = vmatpush1.bf16.msra.mxu0 0
        %311 = vmatprep.subr.bf16.mxu0 0
        %312 = vmatpush1.bf16.msra.mxu0 0
        %313 = vmatprep.subr.bf16.mxu0 0
        %314 = vmatpush1.bf16.msra.mxu0 0
        %315 = vmatprep.subr.bf16.mxu0 0
        %316 = vmatpush1.bf16.msra.mxu0 0
        %317 = vmatprep.subr.bf16.mxu0 0
        %318 = vmatpush1.bf16.msra.mxu0 0
        %319 = vmatprep.subr.bf16.mxu0 0
        %320 = vmatpush1.bf16.msra.mxu0 0
        %321 = vmatprep.subr.bf16.mxu0 0
        %322 = vmatpush1.bf16.msra.mxu0 0
        %323 = vmatprep.subr.bf16.mxu0 0
        %324 = vmatpush1.bf16.msra.mxu0 0
        %325 = vmatprep.subr.bf16.mxu0 0
        %326 = vmatpush1.bf16.msra.mxu0 0
        %327 = vmatprep.subr.bf16.mxu0 0
        %328 = vmatpush1.bf16.msra.mxu0 0
        %329 = vmatprep.subr.bf16.mxu0 0
        %330 = vmatpush1.bf16.msra.mxu0 0
        %331 = vmatprep.mubr.bf16.mxu0 0
        %332 = vmatmul.mubr.bf16.gmra.mrb[0].mxu0 %v297
        %v333 = vpop.f32.mrb[0].mxu0
        %v334 = vadd.f32 %v233, %v333
        %v335 = vpop.f32.mrb[0].mxu0
        %v336 = vadd.f32 %v233, %v335
        %v337 = vpop.f32.mrb[0].mxu0
        %v338 = vpop.f32.mrb[0].mxu0
        %339 = vdwg.mxu0
        %340 = vmatprep.subr.bf16.mxu0 %v274
        %341 = vmatpush1.bf16.msra.mxu0 %v273
        %342 = vmatprep.subr.bf16.mxu0 %v278
        %343 = vmatpush1.bf16.msra.mxu0 %v277
        %344 = vmatprep.subr.bf16.mxu0 %v282
        %345 = vmatpush1.bf16.msra.mxu0 %v281
        %346 = vmatprep.subr.bf16.mxu0 0
        %347 = vmatpush1.bf16.msra.mxu0 0
        %348 = vmatprep.subr.bf16.mxu0 0
        %349 = vmatpush1.bf16.msra.mxu0 0
        %350 = vmatprep.subr.bf16.mxu0 0
        %351 = vmatpush1.bf16.msra.mxu0 0
        %352 = vmatprep.subr.bf16.mxu0 0
        %353 = vmatpush1.bf16.msra.mxu0 0
        %354 = vmatprep.subr.bf16.mxu0 0
        %355 = vmatpush1.bf16.msra.mxu0 0
        %356 = vmatprep.subr.bf16.mxu0 0
        %357 = vmatpush1.bf16.msra.mxu0 0
        %358 = vmatprep.subr.bf16.mxu0 0
        %359 = vmatpush1.bf16.msra.mxu0 0
        %360 = vmatprep.subr.bf16.mxu0 0
        %361 = vmatpush1.bf16.msra.mxu0 0
        %362 = vmatprep.subr.bf16.mxu0 0
        %363 = vmatpush1.bf16.msra.mxu0 0
        %364 = vmatprep.subr.bf16.mxu0 0
        %365 = vmatpush1.bf16.msra.mxu0 0
        %366 = vmatprep.subr.bf16.mxu0 0
        %367 = vmatpush1.bf16.msra.mxu0 0
        %368 = vmatprep.subr.bf16.mxu0 0
        %369 = vmatpush1.bf16.msra.mxu0 0
        %370 = vmatprep.subr.bf16.mxu0 0
        %371 = vmatpush1.bf16.msra.mxu0 0
        %372 = vmatprep.mubr.bf16.mxu0 0
        %373 = vmatmul.mubr.bf16.gmra.mrb[0].mxu0 %v297
        %v374 = vpop.f32.mrb[0].mxu0
        %v375 = vadd.f32 %v233, %v374
        %v376 = vpop.f32.mrb[0].mxu0
        %v377 = vadd.f32 %v233, %v376
        %v378 = vpop.f32.mrb[0].mxu0
        %v379 = vpop.f32.mrb[0].mxu0
        %380 = vdwg.mxu0
        %vm381 = vcmp.ge.f32.partialorder %v334, 0.0
        %vm382 = vcmp.ge.f32.partialorder %v336, 0.0
        %vm383 = vcmp.ge.f32.partialorder %v375, 0.0
        %vm384 = vcmp.ge.f32.partialorder %v377, 0.0
        %v385 = vmul.f32 %v334, 0.2
        %v386 = vmul.f32 %v336, 0.2
        %v387 = vmul.f32 %v375, 0.2
        %v388 = vmul.f32 %v377, 0.2
        %v389 = vsel %vm381, %v334, %v385
        %v390 = vsel %vm382, %v336, %v386
        %v391 = vsel %vm383, %v375, %v387
        %v392 = vsel %vm384, %v377, %v388
        %v393 = vpack.c.bf16 %v389, %v389
        %v394 = vpack.c.bf16 %v390, %v390
        %v395 = vpack.c.bf16 %v391, %v391
        %v396 = vpack.c.bf16 %v392, %v392
        %v401 = vunpack.c.l.b16 %v393
        %v402 = vunpack.c.l.b16 %v394
        %v403 = vunpack.c.l.b16 %v395
        %v404 = vunpack.c.l.b16 %v396
        %v405 = vpack.c.b16 %v402, %v401
        %v406 = vpack.c.b16 %v404, %v403
        %409 = vst [vmem:[%s213] sm:$0xff] %v405
        %410 = vst [vmem:[%s213 + $0x8] sm:$0xff] %v406
        %s411 = smul.u32 4, %s14
        %p412 = scmp.lt.s32.totalorder %s411, 15
        %s413 = scalar_select %p412, %s411, 15
        %s414 = smul.addr %s413, 4
        %s415 = scalar_lea.vmem %s3, %s414
        // Predicated region
        $region56: #{discriminator_forward.4} parent=50 // pred_check
          %p416 = pneg %p100
        $region57: #{discriminator_forward.4} parent=50 // pred_check_branch
          %418 = sbr.rel (%p416) target = $region59
        $region58: #{discriminator_forward.4} parent=50 // pred_region
          %s419 = smul.u32 4, %s14
        $region59: #{discriminator_forward.4} parent=50 // pred_fallthru
          _
      $region51: #{discriminator_forward.4} parent=5 // pred_fallthru
        _
      %p420 = scmp.le.s32.totalorder 2, %s9
      // Predicated region
      $region60: #{discriminator_forward.4} parent=5 // pred_check
        %p421 = pneg %p420
      $region61: #{discriminator_forward.4} parent=5 // pred_check_branch
        %423 = sbr.rel (%p421) target = $region63
      $region62: #{discriminator_forward.4} parent=5 // pred_region
        %s424 = ssub.s32 %s9, 2
        // Predicated region
        $region64: #{discriminator_forward.4} parent=62 // pred_check
          %p425 = pneg %p106
        $region65: #{discriminator_forward.4} parent=62 // pred_check_branch
          %427 = sbr.rel (%p425) target = $region67
        $region66: #{discriminator_forward.4} parent=62 // pred_region
          %s428 = smul.u32 4, %s15
          %p429 = scmp.lt.s32.totalorder %s428, 15
          %s430 = scalar_select %p429, %s428, 15
          %s431 = smul.addr %s430, 4
          %s432 = scalar_lea.vmem %s3, %s431
        $region67: #{discriminator_forward.4} parent=62 // pred_fallthru
          _
      $region63: #{discriminator_forward.4} parent=5 // pred_fallthru
        _
    $region6: #{discriminator_forward.4} parent=1 // loop_footer
      %s13 = sadd.s32 1, %s9
    $region7: #{discriminator_forward.4} parent=1 // loop_footer_branch
      %8 = sbr.rel target = $region3
    $region8: #{discriminator_forward.4} parent=1 // loop_exit
      _

// kernel: discriminator_forward.5
$region0: #{discriminator_forward.5}
  #allocation0 [shape = 'u32[]', space=smem, size = 0x4, offset = 0x4, fixed_abs, tag = 'smem constant byte address 0x4 - core index']
  #allocation1 [shape = 'u32[144,128]{1,0:T(1,128)}', space=vmem, size = 0x12000, scoped, tag = 'internal scratch']
  %s0 = inlined_call_operand.vmem [shape: bf16[128,512], index: 0, kind: input, shape index: {}]
  %s1 = inlined_call_operand.vmem [shape: bf16[16,128], index: 1, kind: input, shape index: {}]
  %s2 = inlined_call_operand.vmem [shape: f32[16,2], index: 2, kind: input, shape index: {}]
  %s3 = inlined_call_operand.vmem [shape: bf16[16,512], index: 3, kind: output, shape index: {}]
  %s4 = sld [smem:[#allocation0]]
  $region22: #{discriminator_forward.5} parent=0
    _
  %s6 = ssub.s32 1, %s4
  %s7 = scalar_select 0, %s6, %s4
  // Predicated region
  $region2: #{discriminator_forward.5} parent=0 // pred_check
    _
  $region3: #{discriminator_forward.5} parent=0 // pred_check_branch
    %9 = sbr.rel (0) target = $region5
  $region4: #{discriminator_forward.5} parent=0 // pred_region
    _
  $region5: #{discriminator_forward.5} parent=0 // pred_fallthru
    _
  // Predicated region
  $region6: #{discriminator_forward.5} parent=0 // pred_check
    _
  $region7: #{discriminator_forward.5} parent=0 // pred_check_branch
    %11 = sbr.rel (0) target = $region9
  $region8: #{discriminator_forward.5} parent=0 // pred_region
    _
  $region9: #{discriminator_forward.5} parent=0 // pred_fallthru
    _
  // Predicated region
  $region10: #{discriminator_forward.5} parent=0 // pred_check
    _
  $region11: #{discriminator_forward.5} parent=0 // pred_check_branch
    %13 = sbr.rel (0) target = $region13
  $region12: #{discriminator_forward.5} parent=0 // pred_region
    _
  $region13: #{discriminator_forward.5} parent=0 // pred_fallthru
    _
  %v15 = vld [vmem:[%s1] sm:$0xf]
  %v16 = vld [vmem:[%s1 + $0x4] sm:$0xf]
  %v17 = vld [vmem:[%s0] sm:$0xff]
  %v18 = vld [vmem:[%s0 + $0x8] sm:$0xff]
  %v19 = vld [vmem:[%s0 + $0x10] sm:$0xff]
  %v20 = vld [vmem:[%s0 + $0x18] sm:$0xff]
  %v21 = vld [vmem:[%s0 + $0x20] sm:$0xff]
  %v22 = vld [vmem:[%s0 + $0x28] sm:$0xff]
  %v23 = vld [vmem:[%s0 + $0x30] sm:$0xff]
  %v24 = vld [vmem:[%s0 + $0x38] sm:$0xff]
  %v25 = vld [vmem:[%s0 + $0x40] sm:$0xff]
  %v26 = vld [vmem:[%s0 + $0x48] sm:$0xff]
  %v27 = vld [vmem:[%s0 + $0x50] sm:$0xff]
  %v28 = vld [vmem:[%s0 + $0x58] sm:$0xff]
  %v29 = vld [vmem:[%s0 + $0x60] sm:$0xff]
  %v30 = vld [vmem:[%s0 + $0x68] sm:$0xff]
  %v31 = vld [vmem:[%s0 + $0x70] sm:$0xff]
  %v32 = vld [vmem:[%s0 + $0x78] sm:$0xff]
  %v33 = vld [vmem:[%s0 + $0x80] sm:$0xff]
  %v34 = vld [vmem:[%s0 + $0x88] sm:$0xff]
  %v35 = vld [vmem:[%s0 + $0x90] sm:$0xff]
  %v36 = vld [vmem:[%s0 + $0x98] sm:$0xff]
  %v37 = vld [vmem:[%s0 + $0xa0] sm:$0xff]
  %v38 = vld [vmem:[%s0 + $0xa8] sm:$0xff]
  %v39 = vld [vmem:[%s0 + $0xb0] sm:$0xff]
  %v40 = vld [vmem:[%s0 + $0xb8] sm:$0xff]
  %v41 = vld [vmem:[%s0 + $0xc0] sm:$0xff]
  %v42 = vld [vmem:[%s0 + $0xc8] sm:$0xff]
  %v43 = vld [vmem:[%s0 + $0xd0] sm:$0xff]
  %v44 = vld [vmem:[%s0 + $0xd8] sm:$0xff]
  %v45 = vld [vmem:[%s0 + $0xe0] sm:$0xff]
  %v46 = vld [vmem:[%s0 + $0xe8] sm:$0xff]
  %v47 = vld [vmem:[%s0 + $0xf0] sm:$0xff]
  %v48 = vld [vmem:[%s0 + $0xf8] sm:$0xff]
  %v51 = vunpack.c.l.b16 %v15
  %v52 = vunpack.c.l.b16 %v16
  %v53 = vpack.c.b16 %v52, %v51
  %v87 = vunpack.c.l.b16 %v17
  %v88 = vunpack.c.h.b16 %v17
  %v89 = vunpack.c.l.b16 %v18
  %v90 = vunpack.c.h.b16 %v18
  %v91 = vunpack.c.l.b16 %v19
  %v92 = vunpack.c.h.b16 %v19
  %v93 = vunpack.c.l.b16 %v20
  %v94 = vunpack.c.h.b16 %v20
  %v95 = vunpack.c.l.b16 %v21
  %v96 = vunpack.c.h.b16 %v21
  %v97 = vunpack.c.l.b16 %v22
  %v98 = vunpack.c.h.b16 %v22
  %v99 = vunpack.c.l.b16 %v23
  %v100 = vunpack.c.h.b16 %v23
  %v101 = vunpack.c.l.b16 %v24
  %v102 = vunpack.c.h.b16 %v24
  %v103 = vunpack.c.l.b16 %v25
  %v104 = vunpack.c.h.b16 %v25
  %v105 = vunpack.c.l.b16 %v26
  %v106 = vunpack.c.h.b16 %v26
  %v107 = vunpack.c.l.b16 %v27
  %v108 = vunpack.c.h.b16 %v27
  %v109 = vunpack.c.l.b16 %v28
  %v110 = vunpack.c.h.b16 %v28
  %v111 = vunpack.c.l.b16 %v29
  %v112 = vunpack.c.h.b16 %v29
  %v113 = vunpack.c.l.b16 %v30
  %v114 = vunpack.c.h.b16 %v30
  %v115 = vunpack.c.l.b16 %v31
  %v116 = vunpack.c.h.b16 %v31
  %v117 = vunpack.c.l.b16 %v32
  %v118 = vunpack.c.h.b16 %v32
  %v119 = vunpack.c.l.b16 %v33
  %v120 = vunpack.c.h.b16 %v33
  %v121 = vunpack.c.l.b16 %v34
  %v122 = vunpack.c.h.b16 %v34
  %v123 = vunpack.c.l.b16 %v35
  %v124 = vunpack.c.h.b16 %v35
  %v125 = vunpack.c.l.b16 %v36
  %v126 = vunpack.c.h.b16 %v36
  %v127 = vunpack.c.l.b16 %v37
  %v128 = vunpack.c.h.b16 %v37
  %v129 = vunpack.c.l.b16 %v38
  %v130 = vunpack.c.h.b16 %v38
  %v131 = vunpack.c.l.b16 %v39
  %v132 = vunpack.c.h.b16 %v39
  %v133 = vunpack.c.l.b16 %v40
  %v134 = vunpack.c.h.b16 %v40
  %v135 = vunpack.c.l.b16 %v41
  %v136 = vunpack.c.h.b16 %v41
  %v137 = vunpack.c.l.b16 %v42
  %v138 = vunpack.c.h.b16 %v42
  %v139 = vunpack.c.l.b16 %v43
  %v140 = vunpack.c.h.b16 %v43
  %v141 = vunpack.c.l.b16 %v44
  %v142 = vunpack.c.h.b16 %v44
  %v143 = vunpack.c.l.b16 %v45
  %v144 = vunpack.c.h.b16 %v45
  %v145 = vunpack.c.l.b16 %v46
  %v146 = vunpack.c.h.b16 %v46
  %v147 = vunpack.c.l.b16 %v47
  %v148 = vunpack.c.h.b16 %v47
  %v149 = vunpack.c.l.b16 %v48
  %v150 = vunpack.c.h.b16 %v48
  %v151 = vpack.c.b16 %v91, %v87
  %v152 = vpack.c.b16 %v92, %v88
  %v153 = vpack.c.b16 %v93, %v89
  %v154 = vpack.c.b16 %v94, %v90
  %v155 = vpack.c.b16 %v99, %v95
  %v156 = vpack.c.b16 %v100, %v96
  %v157 = vpack.c.b16 %v101, %v97
  %v158 = vpack.c.b16 %v102, %v98
  %v159 = vpack.c.b16 %v107, %v103
  %v160 = vpack.c.b16 %v108, %v104
  %v161 = vpack.c.b16 %v109, %v105
  %v162 = vpack.c.b16 %v110, %v106
  %v163 = vpack.c.b16 %v115, %v111
  %v164 = vpack.c.b16 %v116, %v112
  %v165 = vpack.c.b16 %v117, %v113
  %v166 = vpack.c.b16 %v118, %v114
  %v167 = vpack.c.b16 %v123, %v119
  %v168 = vpack.c.b16 %v124, %v120
  %v169 = vpack.c.b16 %v125, %v121
  %v170 = vpack.c.b16 %v126, %v122
  %v171 = vpack.c.b16 %v131, %v127
  %v172 = vpack.c.b16 %v132, %v128
  %v173 = vpack.c.b16 %v133, %v129
  %v174 = vpack.c.b16 %v134, %v130
  %v175 = vpack.c.b16 %v139, %v135
  %v176 = vpack.c.b16 %v140, %v136
  %v177 = vpack.c.b16 %v141, %v137
  %v178 = vpack.c.b16 %v142, %v138
  %v179 = vpack.c.b16 %v147, %v143
  %v180 = vpack.c.b16 %v148, %v144
  %v181 = vpack.c.b16 %v149, %v145
  %v182 = vpack.c.b16 %v150, %v146
  %215 = vmatprep.subr.bf16.mxu0 %v152
  %216 = vmatpush1.bf16.msra.mxu0 %v151
  %217 = vmatprep.subr.bf16.mxu0 %v156
  %218 = vmatpush1.bf16.msra.mxu0 %v155
  %219 = vmatprep.subr.bf16.mxu0 %v160
  %220 = vmatpush1.bf16.msra.mxu0 %v159
  %221 = vmatprep.subr.bf16.mxu0 %v164
  %222 = vmatpush1.bf16.msra.mxu0 %v163
  %223 = vmatprep.subr.bf16.mxu0 %v168
  %224 = vmatpush1.bf16.msra.mxu0 %v167
  %225 = vmatprep.subr.bf16.mxu0 %v172
  %226 = vmatpush1.bf16.msra.mxu0 %v171
  %227 = vmatprep.subr.bf16.mxu0 %v176
  %228 = vmatpush1.bf16.msra.mxu0 %v175
  %229 = vmatprep.subr.bf16.mxu0 %v180
  %230 = vmatpush1.bf16.msra.mxu0 %v179
  %231 = vmatprep.subr.bf16.mxu0 0
  %232 = vmatpush1.bf16.msra.mxu0 0
  %233 = vmatprep.subr.bf16.mxu0 0
  %234 = vmatpush1.bf16.msra.mxu0 0
  %235 = vmatprep.subr.bf16.mxu0 0
  %236 = vmatpush1.bf16.msra.mxu0 0
  %237 = vmatprep.subr.bf16.mxu0 0
  %238 = vmatpush1.bf16.msra.mxu0 0
  %239 = vmatprep.subr.bf16.mxu0 0
  %240 = vmatpush1.bf16.msra.mxu0 0
  %241 = vmatprep.subr.bf16.mxu0 0
  %242 = vmatpush1.bf16.msra.mxu0 0
  %243 = vmatprep.subr.bf16.mxu0 0
  %244 = vmatpush1.bf16.msra.mxu0 0
  %245 = vmatprep.subr.bf16.mxu0 0
  %246 = vmatpush1.bf16.msra.mxu0 0
  %247 = vmatprep.mubr.bf16.mxu0 0
  %248 = vmatmul.mubr.bf16.gmra.mrb[0].mxu0 %v53
  %v249 = vpop.f32.mrb[0].mxu0
  %v250 = vadd.f32 0.0, %v249
  %v251 = vpop.f32.mrb[0].mxu0
  %v252 = vadd.f32 0.0, %v251
  %v253 = vpop.f32.mrb[0].mxu0
  %v254 = vadd.f32 0.0, %v253
  %v255 = vpop.f32.mrb[0].mxu0
  %v256 = vadd.f32 0.0, %v255
  %257 = vdwg.mxu0
  %258 = vmatprep.subr.bf16.mxu0 %v154
  %259 = vmatpush1.bf16.msra.mxu0 %v153
  %260 = vmatprep.subr.bf16.mxu0 %v158
  %261 = vmatpush1.bf16.msra.mxu0 %v157
  %262 = vmatprep.subr.bf16.mxu0 %v162
  %263 = vmatpush1.bf16.msra.mxu0 %v161
  %264 = vmatprep.subr.bf16.mxu0 %v166
  %265 = vmatpush1.bf16.msra.mxu0 %v165
  %266 = vmatprep.subr.bf16.mxu0 %v170
  %267 = vmatpush1.bf16.msra.mxu0 %v169
  %268 = vmatprep.subr.bf16.mxu0 %v174
  %269 = vmatpush1.bf16.msra.mxu0 %v173
  %270 = vmatprep.subr.bf16.mxu0 %v178
  %271 = vmatpush1.bf16.msra.mxu0 %v177
  %272 = vmatprep.subr.bf16.mxu0 %v182
  %273 = vmatpush1.bf16.msra.mxu0 %v181
  %274 = vmatprep.subr.bf16.mxu0 0
  %275 = vmatpush1.bf16.msra.mxu0 0
  %276 = vmatprep.subr.bf16.mxu0 0
  %277 = vmatpush1.bf16.msra.mxu0 0
  %278 = vmatprep.subr.bf16.mxu0 0
  %279 = vmatpush1.bf16.msra.mxu0 0
  %280 = vmatprep.subr.bf16.mxu0 0
  %281 = vmatpush1.bf16.msra.mxu0 0
  %282 = vmatprep.subr.bf16.mxu0 0
  %283 = vmatpush1.bf16.msra.mxu0 0
  %284 = vmatprep.subr.bf16.mxu0 0
  %285 = vmatpush1.bf16.msra.mxu0 0
  %286 = vmatprep.subr.bf16.mxu0 0
  %287 = vmatpush1.bf16.msra.mxu0 0
  %288 = vmatprep.subr.bf16.mxu0 0
  %289 = vmatpush1.bf16.msra.mxu0 0
  %290 = vmatprep.mubr.bf16.mxu0 0
  %291 = vmatmul.mubr.bf16.gmra.mrb[0].mxu0 %v53
  %v292 = vpop.f32.mrb[0].mxu0
  %v293 = vadd.f32 0.0, %v292
  %v294 = vpop.f32.mrb[0].mxu0
  %v295 = vadd.f32 0.0, %v294
  %v296 = vpop.f32.mrb[0].mxu0
  %v297 = vadd.f32 0.0, %v296
  %v298 = vpop.f32.mrb[0].mxu0
  %v299 = vadd.f32 0.0, %v298
  %300 = vdwg.mxu0
  %v301 = vadd.f32 %v250, %v252
  %v302 = vadd.f32 %v301, %v293
  %v303 = vadd.f32 %v302, %v295
  %304 = vadd.xlane.f32.xlu0 %v303
  %v305 = vpop.xlane.xlu0 %304
  %v306 = vadd.f32 %v254, %v256
  %v307 = vadd.f32 %v306, %v297
  %v308 = vadd.f32 %v307, %v299
  %309 = vadd.xlane.f32.xlu0 %v308
  %v310 = vpop.xlane.xlu0 %309
  %v311 = vmul.f32 %v305, 0.001953125
  %v312 = vmul.f32 %v310, 0.001953125
  %v313 = vsub.f32 %v250, %v311
  %v314 = vsub.f32 %v252, %v311
  %v315 = vsub.f32 %v293, %v311
  %v316 = vsub.f32 %v295, %v311
  %v317 = vsub.f32 %v254, %v312
  %v318 = vsub.f32 %v256, %v312
  %v319 = vsub.f32 %v297, %v312
  %v320 = vsub.f32 %v299, %v312
  %v321 = vmul.f32 %v313, %v313
  %v322 = vmul.f32 %v314, %v314
  %v323 = vmul.f32 %v315, %v315
  %v324 = vmul.f32 %v316, %v316
  %v325 = vmul.f32 %v317, %v317
  %v326 = vmul.f32 %v318, %v318
  %v327 = vmul.f32 %v319, %v319
  %v328 = vmul.f32 %v320, %v320
  %v329 = vadd.f32 %v321, %v322
  %v330 = vadd.f32 %v329, %v323
  %v331 = vadd.f32 %v330, %v324
  %332 = vadd.xlane.f32.xlu0 %v331
  %v333 = vpop.xlane.xlu0 %332
  %v334 = vadd.f32 %v325, %v326
  %v335 = vadd.f32 %v334, %v327
  %v336 = vadd.f32 %v335, %v328
  %337 = vadd.xlane.f32.xlu0 %v336
  %v338 = vpop.xlane.xlu0 %337
  %v339 = vmul.f32 %v333, 0.001953125
  %v340 = vmul.f32 %v338, 0.001953125
  %v341 = vmax.f32 %v339, 0.0
  %v342 = vmax.f32 %v340, 0.0
  %v343 = vadd.f32 %v341, 1e-05
  %v344 = vadd.f32 %v342, 1e-05
  %v345 = vrsqrt.pop %v343
  %v346 = vrsqrt.pop %v344
  %v347 = vld [vmem:[%s2] sm:$0xff]
  %v348 = vld [vmem:[%s2 + $0x8] sm:$0xff]
  %v349 = vmul.f32 %v347, %v345
  %v350 = vmul.f32 %v348, %v346
  %352 = vset.pattern.permute.xlu0 0
  %353 = vperm.xlu0 %352, %v349
  %v354 = vpop.permute.xlu0 %353
  %357 = vset.pattern.permute.xlu0 0
  %358 = vperm.xlu0 %357, %v350
  %v359 = vpop.permute.xlu0 %358
  %v361 = vmul.f32 %v313, %v354
  %v362 = vmul.f32 %v314, %v354
  %v363 = vmul.f32 %v315, %v354
  %v364 = vmul.f32 %v316, %v354
  %v365 = vmul.f32 %v317, %v359
  %v366 = vmul.f32 %v318, %v359
  %v367 = vmul.f32 %v319, %v359
  %v368 = vmul.f32 %v320, %v359
  %370 = vset.pattern.permute.xlu0 1
  %371 = vperm.xlu0 %370, %v347
  %v372 = vpop.permute.xlu0 %371
  %375 = vset.pattern.permute.xlu0 1
  %376 = vperm.xlu0 %375, %v348
  %v377 = vpop.permute.xlu0 %376
  %v379 = vadd.f32 %v361, %v372
  %v380 = vadd.f32 %v362, %v372
  %v381 = vadd.f32 %v363, %v372
  %v382 = vadd.f32 %v364, %v372
  %v383 = vadd.f32 %v365, %v377
  %v384 = vadd.f32 %v366, %v377
  %v385 = vadd.f32 %v367, %v377
  %v386 = vadd.f32 %v368, %v377
  %vm387 = vcmp.ge.f32.partialorder %v379, 0.0
  %vm388 = vcmp.ge.f32.partialorder %v380, 0.0
  %vm389 = vcmp.ge.f32.partialorder %v381, 0.0
  %vm390 = vcmp.ge.f32.partialorder %v382, 0.0
  %vm391 = vcmp.ge.f32.partialorder %v383, 0.0
  %vm392 = vcmp.ge.f32.partialorder %v384, 0.0
  %vm393 = vcmp.ge.f32.partialorder %v385, 0.0
  %vm394 = vcmp.ge.f32.partialorder %v386, 0.0
  %v395 = vmul.f32 %v379, 0.2
  %v396 = vmul.f32 %v380, 0.2
  %v397 = vmul.f32 %v381, 0.2
  %v398 = vmul.f32 %v382, 0.2
  %v399 = vmul.f32 %v383, 0.2
  %v400 = vmul.f32 %v384, 0.2
  %v401 = vmul.f32 %v385, 0.2
  %v402 = vmul.f32 %v386, 0.2
  %v403 = vsel %vm387, %v379, %v395
  %v404 = vsel %vm388, %v380, %v396
  %v405 = vsel %vm389, %v381, %v397
  %v406 = vsel %vm390, %v382, %v398
  %v407 = vsel %vm391, %v383, %v399
  %v408 = vsel %vm392, %v384, %v400
  %v409 = vsel %vm393, %v385, %v401
  %v410 = vsel %vm394, %v386, %v402
  %v411 = vpack.c.bf16 %v407, %v403
  %v412 = vpack.c.bf16 %v408, %v404
  %v413 = vpack.c.bf16 %v409, %v405
  %v414 = vpack.c.bf16 %v410, %v406
  %v419 = vunpack.c.l.b16 %v411
  %v420 = vunpack.c.l.b16 %v412
  %v421 = vunpack.c.l.b16 %v413
  %v422 = vunpack.c.l.b16 %v414
  %v423 = vunpack.c.h.b16 %v411
  %v424 = vunpack.c.h.b16 %v412
  %v425 = vunpack.c.h.b16 %v413
  %v426 = vunpack.c.h.b16 %v414
  %v427 = vpack.c.b16 %v420, %v419
  %v428 = vpack.c.b16 %v422, %v421
  %v429 = vpack.c.b16 %v424, %v423
  %v430 = vpack.c.b16 %v426, %v425
  %435 = vst [vmem:[%s3] sm:$0xff] %v427
  %436 = vst [vmem:[%s3 + $0x8] sm:$0xff] %v428
  %437 = vst [vmem:[%s3 + $0x10] sm:$0xff] %v429
  %438 = vst [vmem:[%s3 + $0x18] sm:$0xff] %v430
  // Predicated region
  $region14: #{discriminator_forward.5} parent=0 // pred_check
    _
  $region15: #{discriminator_forward.5} parent=0 // pred_check_branch
    %440 = sbr.rel (0) target = $region17
  $region16: #{discriminator_forward.5} parent=0 // pred_region
    _
  $region17: #{discriminator_forward.5} parent=0 // pred_fallthru
    _
  // Predicated region
  $region18: #{discriminator_forward.5} parent=0 // pred_check
    _
  $region19: #{discriminator_forward.5} parent=0 // pred_check_branch
    %442 = sbr.rel (0) target = $region21
  $region20: #{discriminator_forward.5} parent=0 // pred_region
    _
  $region21: #{discriminator_forward.5} parent=0 // pred_fallthru
    _

// kernel: discriminator_forward.6
$region0: #{discriminator_forward.6}
  #allocation0 [shape = 'u32[]', space=smem, size = 0x4, offset = 0x4, fixed_abs, tag = 'smem constant byte address 0x4 - core index']
  #allocation1 [shape = 'u32[144,128]{1,0:T(1,128)}', space=vmem, size = 0x12000, scoped, tag = 'internal scratch']
  %s0 = inlined_call_operand.vmem [shape: bf16[256,128], index: 0, kind: input, shape index: {}]
  %s1 = inlined_call_operand.vmem [shape: bf16[32,256], index: 1, kind: input, shape index: {}]
  %s2 = inlined_call_operand.vmem [shape: f32[32,2], index: 2, kind: input, shape index: {}]
  %s3 = inlined_call_operand.vmem [shape: bf16[32,128], index: 3, kind: output, shape index: {}]
  %s4 = sld [smem:[#allocation0]]
  $region22: #{discriminator_forward.6} parent=0
    _
  %s6 = ssub.s32 1, %s4
  %s7 = scalar_select 0, %s6, %s4
  // Predicated region
  $region2: #{discriminator_forward.6} parent=0 // pred_check
    _
  $region3: #{discriminator_forward.6} parent=0 // pred_check_branch
    %9 = sbr.rel (0) target = $region5
  $region4: #{discriminator_forward.6} parent=0 // pred_region
    _
  $region5: #{discriminator_forward.6} parent=0 // pred_fallthru
    _
  // Predicated region
  $region6: #{discriminator_forward.6} parent=0 // pred_check
    _
  $region7: #{discriminator_forward.6} parent=0 // pred_check_branch
    %11 = sbr.rel (0) target = $region9
  $region8: #{discriminator_forward.6} parent=0 // pred_region
    _
  $region9: #{discriminator_forward.6} parent=0 // pred_fallthru
    _
  // Predicated region
  $region10: #{discriminator_forward.6} parent=0 // pred_check
    _
  $region11: #{discriminator_forward.6} parent=0 // pred_check_branch
    %13 = sbr.rel (0) target = $region13
  $region12: #{discriminator_forward.6} parent=0 // pred_region
    _
  $region13: #{discriminator_forward.6} parent=0 // pred_fallthru
    _
  %v15 = vld [vmem:[%s1] sm:$0xff]
  %v16 = vld [vmem:[%s1 + $0x8] sm:$0xff]
  %v17 = vld [vmem:[%s1 + $0x10] sm:$0xff]
  %v18 = vld [vmem:[%s1 + $0x18] sm:$0xff]
  %v19 = vld [vmem:[%s0] sm:$0xf]
  %v20 = vld [vmem:[%s0 + $0x4] sm:$0xf]
  %v21 = vld [vmem:[%s0 + $0x8] sm:$0xf]
  %v22 = vld [vmem:[%s0 + $0xc] sm:$0xf]
  %v23 = vld [vmem:[%s0 + $0x10] sm:$0xf]
  %v24 = vld [vmem:[%s0 + $0x14] sm:$0xf]
  %v25 = vld [vmem:[%s0 + $0x18] sm:$0xf]
  %v26 = vld [vmem:[%s0 + $0x1c] sm:$0xf]
  %v27 = vld [vmem:[%s0 + $0x20] sm:$0xf]
  %v28 = vld [vmem:[%s0 + $0x24] sm:$0xf]
  %v29 = vld [vmem:[%s0 + $0x28] sm:$0xf]
  %v30 = vld [vmem:[%s0 + $0x2c] sm:$0xf]
  %v31 = vld [vmem:[%s0 + $0x30] sm:$0xf]
  %v32 = vld [vmem:[%s0 + $0x34] sm:$0xf]
  %v33 = vld [vmem:[%s0 + $0x38] sm:$0xf]
  %v34 = vld [vmem:[%s0 + $0x3c] sm:$0xf]
  %v35 = vld [vmem:[%s0 + $0x40] sm:$0xf]
  %v36 = vld [vmem:[%s0 + $0x44] sm:$0xf]
  %v37 = vld [vmem:[%s0 + $0x48] sm:$0xf]
  %v38 = vld [vmem:[%s0 + $0x4c] sm:$0xf]
  %v39 = vld [vmem:[%s0 + $0x50] sm:$0xf]
  %v40 = vld [vmem:[%s0 + $0x54] sm:$0xf]
  %v41 = vld [vmem:[%s0 + $0x58] sm:$0xf]
  %v42 = vld [vmem:[%s0 + $0x5c] sm:$0xf]
  %v43 = vld [vmem:[%s0 + $0x60] sm:$0xf]
  %v44 = vld [vmem:[%s0 + $0x64] sm:$0xf]
  %v45 = vld [vmem:[%s0 + $0x68] sm:$0xf]
  %v46 = vld [vmem:[%s0 + $0x6c] sm:$0xf]
  %v47 = vld [vmem:[%s0 + $0x70] sm:$0xf]
  %v48 = vld [vmem:[%s0 + $0x74] sm:$0xf]
  %v49 = vld [vmem:[%s0 + $0x78] sm:$0xf]
  %v50 = vld [vmem:[%s0 + $0x7c] sm:$0xf]
  %v55 = vunpack.c.l.b16 %v15
  %v56 = vunpack.c.h.b16 %v15
  %v57 = vunpack.c.l.b16 %v16
  %v58 = vunpack.c.h.b16 %v16
  %v59 = vunpack.c.l.b16 %v17
  %v60 = vunpack.c.h.b16 %v17
  %v61 = vunpack.c.l.b16 %v18
  %v62 = vunpack.c.h.b16 %v18
  %v63 = vpack.c.b16 %v57, %v55
  %v64 = vpack.c.b16 %v58, %v56
  %v65 = vpack.c.b16 %v61, %v59
  %v66 = vpack.c.b16 %v62, %v60
  %v103 = vunpack.c.l.b16 %v19
  %v104 = vunpack.c.l.b16 %v20
  %v105 = vunpack.c.l.b16 %v21
  %v106 = vunpack.c.l.b16 %v22
  %v107 = vunpack.c.l.b16 %v23
  %v108 = vunpack.c.l.b16 %v24
  %v109 = vunpack.c.l.b16 %v25
  %v110 = vunpack.c.l.b16 %v26
  %v111 = vunpack.c.l.b16 %v27
  %v112 = vunpack.c.l.b16 %v28
  %v113 = vunpack.c.l.b16 %v29
  %v114 = vunpack.c.l.b16 %v30
  %v115 = vunpack.c.l.b16 %v31
  %v116 = vunpack.c.l.b16 %v32
  %v117 = vunpack.c.l.b16 %v33
  %v118 = vunpack.c.l.b16 %v34
  %v119 = vunpack.c.l.b16 %v35
  %v120 = vunpack.c.l.b16 %v36
  %v121 = vunpack.c.l.b16 %v37
  %v122 = vunpack.c.l.b16 %v38
  %v123 = vunpack.c.l.b16 %v39
  %v124 = vunpack.c.l.b16 %v40
  %v125 = vunpack.c.l.b16 %v41
  %v126 = vunpack.c.l.b16 %v42
  %v127 = vunpack.c.l.b16 %v43
  %v128 = vunpack.c.l.b16 %v44
  %v129 = vunpack.c.l.b16 %v45
  %v130 = vunpack.c.l.b16 %v46
  %v131 = vunpack.c.l.b16 %v47
  %v132 = vunpack.c.l.b16 %v48
  %v133 = vunpack.c.l.b16 %v49
  %v134 = vunpack.c.l.b16 %v50
  %v135 = vpack.c.b16 %v104, %v103
  %v136 = vpack.c.b16 %v106, %v105
  %v137 = vpack.c.b16 %v108, %v107
  %v138 = vpack.c.b16 %v110, %v109
  %v139 = vpack.c.b16 %v112, %v111
  %v140 = vpack.c.b16 %v114, %v113
  %v141 = vpack.c.b16 %v116, %v115
  %v142 = vpack.c.b16 %v118, %v117
  %v143 = vpack.c.b16 %v120, %v119
  %v144 = vpack.c.b16 %v122, %v121
  %v145 = vpack.c.b16 %v124, %v123
  %v146 = vpack.c.b16 %v126, %v125
  %v147 = vpack.c.b16 %v128, %v127
  %v148 = vpack.c.b16 %v130, %v129
  %v149 = vpack.c.b16 %v132, %v131
  %v150 = vpack.c.b16 %v134, %v133
  %167 = vmatprep.subr.bf16.mxu0 0
  %168 = vmatpush1.bf16.msra.mxu0 %v135
  %169 = vmatprep.subr.bf16.mxu0 0
  %170 = vmatpush1.bf16.msra.mxu0 %v136
  %171 = vmatprep.subr.bf16.mxu0 0
  %172 = vmatpush1.bf16.msra.mxu0 %v137
  %173 = vmatprep.subr.bf16.mxu0 0
  %174 = vmatpush1.bf16.msra.mxu0 %v138
  %175 = vmatprep.subr.bf16.mxu0 0
  %176 = vmatpush1.bf16.msra.mxu0 %v139
  %177 = vmatprep.subr.bf16.mxu0 0
  %178 = vmatpush1.bf16.msra.mxu0 %v140
  %179 = vmatprep.subr.bf16.mxu0 0
  %180 = vmatpush1.bf16.msra.mxu0 %v141
  %181 = vmatprep.subr.bf16.mxu0 0
  %182 = vmatpush1.bf16.msra.mxu0 %v142
  %183 = vmatprep.subr.bf16.mxu0 0
  %184 = vmatpush1.bf16.msra.mxu0 %v143
  %185 = vmatprep.subr.bf16.mxu0 0
  %186 = vmatpush1.bf16.msra.mxu0 %v144
  %187 = vmatprep.subr.bf16.mxu0 0
  %188 = vmatpush1.bf16.msra.mxu0 %v145
  %189 = vmatprep.subr.bf16.mxu0 0
  %190 = vmatpush1.bf16.msra.mxu0 %v146
  %191 = vmatprep.subr.bf16.mxu0 0
  %192 = vmatpush1.bf16.msra.mxu0 %v147
  %193 = vmatprep.subr.bf16.mxu0 0
  %194 = vmatpush1.bf16.msra.mxu0 %v148
  %195 = vmatprep.subr.bf16.mxu0 0
  %196 = vmatpush1.bf16.msra.mxu0 %v149
  %197 = vmatprep.subr.bf16.mxu0 0
  %198 = vmatpush1.bf16.msra.mxu0 %v150
  %199 = vmatprep.mubr.bf16.mxu0 %v64
  %200 = vmatmul.mubr.bf16.gmra.mrb[0].mxu0 %v63
  %v201 = vpop.f32.mrb[0].mxu0
  %v202 = vadd.f32 0.0, %v201
  %v203 = vpop.f32.mrb[0].mxu0
  %v204 = vpop.f32.mrb[0].mxu0
  %v205 = vadd.f32 0.0, %v204
  %v206 = vpop.f32.mrb[0].mxu0
  %207 = vmatprep.mubr.bf16.mxu0 %v66
  %208 = vmatmul.mubr.bf16.gmra.mrb[0].mxu0 %v65
  %v209 = vpop.f32.mrb[0].mxu0
  %v210 = vadd.f32 0.0, %v209
  %v211 = vpop.f32.mrb[0].mxu0
  %v212 = vpop.f32.mrb[0].mxu0
  %v213 = vadd.f32 0.0, %v212
  %v214 = vpop.f32.mrb[0].mxu0
  %215 = vdwg.mxu0
  %216 = vadd.xlane.f32.xlu0 %v202
  %v217 = vpop.xlane.xlu0 %216
  %218 = vadd.xlane.f32.xlu0 %v205
  %v219 = vpop.xlane.xlu0 %218
  %220 = vadd.xlane.f32.xlu0 %v210
  %v221 = vpop.xlane.xlu0 %220
  %222 = vadd.xlane.f32.xlu0 %v213
  %v223 = vpop.xlane.xlu0 %222
  %v224 = vmul.f32 %v217, 0.0078125
  %v225 = vmul.f32 %v219, 0.0078125
  %v226 = vmul.f32 %v221, 0.0078125
  %v227 = vmul.f32 %v223, 0.0078125
  %v228 = vsub.f32 %v202, %v224
  %v229 = vsub.f32 %v205, %v225
  %v230 = vsub.f32 %v210, %v226
  %v231 = vsub.f32 %v213, %v227
  %v232 = vmul.f32 %v228, %v228
  %v233 = vmul.f32 %v229, %v229
  %v234 = vmul.f32 %v230, %v230
  %v235 = vmul.f32 %v231, %v231
  %236 = vadd.xlane.f32.xlu0 %v232
  %v237 = vpop.xlane.xlu0 %236
  %238 = vadd.xlane.f32.xlu0 %v233
  %v239 = vpop.xlane.xlu0 %238
  %240 = vadd.xlane.f32.xlu0 %v234
  %v241 = vpop.xlane.xlu0 %240
  %242 = vadd.xlane.f32.xlu0 %v235
  %v243 = vpop.xlane.xlu0 %242
  %v244 = vmul.f32 %v237, 0.0078125
  %v245 = vmul.f32 %v239, 0.0078125
  %v246 = vmul.f32 %v241, 0.0078125
  %v247 = vmul.f32 %v243, 0.0078125
  %v248 = vmax.f32 %v244, 0.0
  %v249 = vmax.f32 %v245, 0.0
  %v250 = vmax.f32 %v246, 0.0
  %v251 = vmax.f32 %v247, 0.0
  %v252 = vadd.f32 %v248, 1e-05
  %v253 = vadd.f32 %v249, 1e-05
  %v254 = vadd.f32 %v250, 1e-05
  %v255 = vadd.f32 %v251, 1e-05
  %v256 = vrsqrt.pop %v252
  %v257 = vrsqrt.pop %v253
  %v258 = vrsqrt.pop %v254
  %v259 = vrsqrt.pop %v255
  %v260 = vld [vmem:[%s2] sm:$0xff]
  %v261 = vld [vmem:[%s2 + $0x8] sm:$0xff]
  %v262 = vld [vmem:[%s2 + $0x10] sm:$0xff]
  %v263 = vld [vmem:[%s2 + $0x18] sm:$0xff]
  %v264 = vmul.f32 %v260, %v256
  %v265 = vmul.f32 %v261, %v257
  %v266 = vmul.f32 %v262, %v258
  %v267 = vmul.f32 %v263, %v259
  %269 = vset.pattern.permute.xlu0 0
  %270 = vperm.xlu0 %269, %v264
  %v271 = vpop.permute.xlu0 %270
  %274 = vset.pattern.permute.xlu0 0
  %275 = vperm.xlu0 %274, %v265
  %v276 = vpop.permute.xlu0 %275
  %279 = vset.pattern.permute.xlu0 0
  %280 = vperm.xlu0 %279, %v266
  %v281 = vpop.permute.xlu0 %280
  %284 = vset.pattern.permute.xlu0 0
  %285 = vperm.xlu0 %284, %v267
  %v286 = vpop.permute.xlu0 %285
  %v288 = vmul.f32 %v228, %v271
  %v289 = vmul.f32 %v229, %v276
  %v290 = vmul.f32 %v230, %v281
  %v291 = vmul.f32 %v231, %v286
  %293 = vset.pattern.permute.xlu0 1
  %294 = vperm.xlu0 %293, %v260
  %v295 = vpop.permute.xlu0 %294
  %298 = vset.pattern.permute.xlu0 1
  %299 = vperm.xlu0 %298, %v261
  %v300 = vpop.permute.xlu0 %299
  %303 = vset.pattern.permute.xlu0 1
  %304 = vperm.xlu0 %303, %v262
  %v305 = vpop.permute.xlu0 %304
  %308 = vset.pattern.permute.xlu0 1
  %309 = vperm.xlu0 %308, %v263
  %v310 = vpop.permute.xlu0 %309
  %v312 = vadd.f32 %v288, %v295
  %v313 = vadd.f32 %v289, %v300
  %v314 = vadd.f32 %v290, %v305
  %v315 = vadd.f32 %v291, %v310
  %vm316 = vcmp.ge.f32.partialorder %v312, 0.0
  %vm317 = vcmp.ge.f32.partialorder %v313, 0.0
  %vm318 = vcmp.ge.f32.partialorder %v314, 0.0
  %vm319 = vcmp.ge.f32.partialorder %v315, 0.0
  %v320 = vmul.f32 %v312, 0.2
  %v321 = vmul.f32 %v313, 0.2
  %v322 = vmul.f32 %v314, 0.2
  %v323 = vmul.f32 %v315, 0.2
  %v324 = vsel %vm316, %v312, %v320
  %v325 = vsel %vm317, %v313, %v321
  %v326 = vsel %vm318, %v314, %v322
  %v327 = vsel %vm319, %v315, %v323
  %v328 = vpack.c.bf16 %v325, %v324
  %v329 = vpack.c.bf16 %v327, %v326
  %v332 = vunpack.c.l.b16 %v328
  %v333 = vunpack.c.h.b16 %v328
  %v334 = vunpack.c.l.b16 %v329
  %v335 = vunpack.c.h.b16 %v329
  %v336 = vpack.c.b16 %v332, %v332
  %v337 = vpack.c.b16 %v333, %v333
  %v338 = vpack.c.b16 %v334, %v334
  %v339 = vpack.c.b16 %v335, %v335
  %344 = vst [vmem:[%s3] sm:$0xf] %v336
  %345 = vst [vmem:[%s3 + $0x4] sm:$0xf] %v337
  %346 = vst [vmem:[%s3 + $0x8] sm:$0xf] %v338
  %347 = vst [vmem:[%s3 + $0xc] sm:$0xf] %v339
  // Predicated region
  $region14: #{discriminator_forward.6} parent=0 // pred_check
    _
  $region15: #{discriminator_forward.6} parent=0 // pred_check_branch
    %349 = sbr.rel (0) target = $region17
  $region16: #{discriminator_forward.6} parent=0 // pred_region
    _
  $region17: #{discriminator_forward.6} parent=0 // pred_fallthru
    _
  // Predicated region
  $region18: #{discriminator_forward.6} parent=0 // pred_check
    _
  $region19: #{discriminator_forward.6} parent=0 // pred_check_branch
    %351 = sbr.rel (0) target = $region21
  $region20: #{discriminator_forward.6} parent=0 // pred_region
    _
  $region21: #{discriminator_forward.6} parent=0 // pred_fallthru
    _

// kernel: discriminator_forward.7
$region0: #{discriminator_forward.7}
  #allocation0 [shape = 'u32[]', space=smem, size = 0x4, offset = 0x4, fixed_abs, tag = 'smem constant byte address 0x4 - core index']
  #allocation1 [shape = 'u32[144,128]{1,0:T(1,128)}', space=vmem, size = 0x12000, scoped, tag = 'internal scratch']
  #allocation2 [shape = 'f32[1,1]{1,0:T(1,128)S(1)}', space=vmem, size = 0x200, scoped, tag = 'scoped memory for discriminator_forward.7']
  %s0 = inlined_call_operand.vmem [shape: bf16[512,32], index: 0, kind: input, shape index: {}]
  %s1 = inlined_call_operand.vmem [shape: bf16[64,512], index: 1, kind: input, shape index: {}]
  %s2 = inlined_call_operand.vmem [shape: f32[64,2], index: 2, kind: input, shape index: {}]
  %s3 = inlined_call_operand.vmem [shape: f32[64,32], index: 3, kind: input, shape index: {}]
  %s4 = inlined_call_operand.vmem [shape: f32[32,2], index: 4, kind: input, shape index: {}]
  %s5 = inlined_call_operand.<no memory space> [shape: f32[1,1], index: 5, kind: input, shape index: {}]
  %s6 = inlined_call_operand.hbm [shape: f32[1,2], index: 6, kind: output, shape index: {}]
  %s7 = sld [smem:[#allocation0]]
  $region34: #{discriminator_forward.7} parent=0
    _
  %s9 = ssub.s32 1, %s7
  %s10 = scalar_select 0, %s9, %s7
  %v11 = vstv %s5
  %12 = vst [vmem:[#allocation2] sm:$0x1] %v11
  $region1: #{discriminator_forward.7} parent=0
    #allocation3 [shape = 'u8[512]{0}', space=vmem, size = 0x400, scoped, tag = 'output window, operand 0, single buffered']
    #allocation4 [shape = 's32[1]{0}', space=sflag, size = 0x4, scoped, tag = 'scoped memory for discriminator_forward.7']
    %13 = vsyncpa [#allocation4], 0
    // Predicated region
    $region2: #{discriminator_forward.7} parent=1 // pred_check
      _
    $region3: #{discriminator_forward.7} parent=1 // pred_check_branch
      %15 = sbr.rel (0) target = $region5
    $region4: #{discriminator_forward.7} parent=1 // pred_region
      _
    $region5: #{discriminator_forward.7} parent=1 // pred_fallthru
      _
    // Predicated region
    $region6: #{discriminator_forward.7} parent=1 // pred_check
      _
    $region7: #{discriminator_forward.7} parent=1 // pred_check_branch
      %17 = sbr.rel (0) target = $region9
    $region8: #{discriminator_forward.7} parent=1 // pred_region
      _
    $region9: #{discriminator_forward.7} parent=1 // pred_fallthru
      _
    // Predicated region
    $region10: #{discriminator_forward.7} parent=1 // pred_check
      _
    $region11: #{discriminator_forward.7} parent=1 // pred_check_branch
      %19 = sbr.rel (0) target = $region13
    $region12: #{discriminator_forward.7} parent=1 // pred_region
      _
    $region13: #{discriminator_forward.7} parent=1 // pred_fallthru
      _
    // Predicated region
    $region14: #{discriminator_forward.7} parent=1 // pred_check
      _
    $region15: #{discriminator_forward.7} parent=1 // pred_check_branch
      %21 = sbr.rel (0) target = $region17
    $region16: #{discriminator_forward.7} parent=1 // pred_region
      _
    $region17: #{discriminator_forward.7} parent=1 // pred_fallthru
      _
    // Predicated region
    $region18: #{discriminator_forward.7} parent=1 // pred_check
      _
    $region19: #{discriminator_forward.7} parent=1 // pred_check_branch
      %23 = sbr.rel (0) target = $region21
    $region20: #{discriminator_forward.7} parent=1 // pred_region
      _
    $region21: #{discriminator_forward.7} parent=1 // pred_fallthru
      _
    // Predicated region
    $region22: #{discriminator_forward.7} parent=1 // pred_check
      _
    $region23: #{discriminator_forward.7} parent=1 // pred_check_branch
      %25 = sbr.rel (0) target = $region25
    $region24: #{discriminator_forward.7} parent=1 // pred_region
      _
    $region25: #{discriminator_forward.7} parent=1 // pred_fallthru
      _
    %v27 = vld [vmem:[%s1] sm:$0xff]
    %v28 = vld [vmem:[%s1 + $0x8] sm:$0xff]
    %v29 = vld [vmem:[%s1 + $0x10] sm:$0xff]
    %v30 = vld [vmem:[%s1 + $0x18] sm:$0xff]
    %v31 = vld [vmem:[%s1 + $0x20] sm:$0xff]
    %v32 = vld [vmem:[%s1 + $0x28] sm:$0xff]
    %v33 = vld [vmem:[%s1 + $0x30] sm:$0xff]
    %v34 = vld [vmem:[%s1 + $0x38] sm:$0xff]
    %v35 = vld [vmem:[%s1 + $0x40] sm:$0xff]
    %v36 = vld [vmem:[%s1 + $0x48] sm:$0xff]
    %v37 = vld [vmem:[%s1 + $0x50] sm:$0xff]
    %v38 = vld [vmem:[%s1 + $0x58] sm:$0xff]
    %v39 = vld [vmem:[%s1 + $0x60] sm:$0xff]
    %v40 = vld [vmem:[%s1 + $0x68] sm:$0xff]
    %v41 = vld [vmem:[%s1 + $0x70] sm:$0xff]
    %v42 = vld [vmem:[%s1 + $0x78] sm:$0xff]
    %v43 = vld [vmem:[%s0] sm:$0xf]
    %v44 = vld [vmem:[%s0 + $0x4] sm:$0xf]
    %v45 = vld [vmem:[%s0 + $0x8] sm:$0xf]
    %v46 = vld [vmem:[%s0 + $0xc] sm:$0xf]
    %v47 = vld [vmem:[%s0 + $0x10] sm:$0xf]
    %v48 = vld [vmem:[%s0 + $0x14] sm:$0xf]
    %v49 = vld [vmem:[%s0 + $0x18] sm:$0xf]
    %v50 = vld [vmem:[%s0 + $0x1c] sm:$0xf]
    %v51 = vld [vmem:[%s0 + $0x20] sm:$0xf]
    %v52 = vld [vmem:[%s0 + $0x24] sm:$0xf]
    %v53 = vld [vmem:[%s0 + $0x28] sm:$0xf]
    %v54 = vld [vmem:[%s0 + $0x2c] sm:$0xf]
    %v55 = vld [vmem:[%s0 + $0x30] sm:$0xf]
    %v56 = vld [vmem:[%s0 + $0x34] sm:$0xf]
    %v57 = vld [vmem:[%s0 + $0x38] sm:$0xf]
    %v58 = vld [vmem:[%s0 + $0x3c] sm:$0xf]
    %v59 = vld [vmem:[%s0 + $0x40] sm:$0xf]
    %v60 = vld [vmem:[%s0 + $0x44] sm:$0xf]
    %v61 = vld [vmem:[%s0 + $0x48] sm:$0xf]
    %v62 = vld [vmem:[%s0 + $0x4c] sm:$0xf]
    %v63 = vld [vmem:[%s0 + $0x50] sm:$0xf]
    %v64 = vld [vmem:[%s0 + $0x54] sm:$0xf]
    %v65 = vld [vmem:[%s0 + $0x58] sm:$0xf]
    %v66 = vld [vmem:[%s0 + $0x5c] sm:$0xf]
    %v67 = vld [vmem:[%s0 + $0x60] sm:$0xf]
    %v68 = vld [vmem:[%s0 + $0x64] sm:$0xf]
    %v69 = vld [vmem:[%s0 + $0x68] sm:$0xf]
    %v70 = vld [vmem:[%s0 + $0x6c] sm:$0xf]
    %v71 = vld [vmem:[%s0 + $0x70] sm:$0xf]
    %v72 = vld [vmem:[%s0 + $0x74] sm:$0xf]
    %v73 = vld [vmem:[%s0 + $0x78] sm:$0xf]
    %v74 = vld [vmem:[%s0 + $0x7c] sm:$0xf]
    %v75 = vld [vmem:[%s0 + $0x80] sm:$0xf]
    %v76 = vld [vmem:[%s0 + $0x84] sm:$0xf]
    %v77 = vld [vmem:[%s0 + $0x88] sm:$0xf]
    %v78 = vld [vmem:[%s0 + $0x8c] sm:$0xf]
    %v79 = vld [vmem:[%s0 + $0x90] sm:$0xf]
    %v80 = vld [vmem:[%s0 + $0x94] sm:$0xf]
    %v81 = vld [vmem:[%s0 + $0x98] sm:$0xf]
    %v82 = vld [vmem:[%s0 + $0x9c] sm:$0xf]
    %v83 = vld [vmem:[%s0 + $0xa0] sm:$0xf]
    %v84 = vld [vmem:[%s0 + $0xa4] sm:$0xf]
    %v85 = vld [vmem:[%s0 + $0xa8] sm:$0xf]
    %v86 = vld [vmem:[%s0 + $0xac] sm:$0xf]
    %v87 = vld [vmem:[%s0 + $0xb0] sm:$0xf]
    %v88 = vld [vmem:[%s0 + $0xb4] sm:$0xf]
    %v89 = vld [vmem:[%s0 + $0xb8] sm:$0xf]
    %v90 = vld [vmem:[%s0 + $0xbc] sm:$0xf]
    %v91 = vld [vmem:[%s0 + $0xc0] sm:$0xf]
    %v92 = vld [vmem:[%s0 + $0xc4] sm:$0xf]
    %v93 = vld [vmem:[%s0 + $0xc8] sm:$0xf]
    %v94 = vld [vmem:[%s0 + $0xcc] sm:$0xf]
    %v95 = vld [vmem:[%s0 + $0xd0] sm:$0xf]
    %v96 = vld [vmem:[%s0 + $0xd4] sm:$0xf]
    %v97 = vld [vmem:[%s0 + $0xd8] sm:$0xf]
    %v98 = vld [vmem:[%s0 + $0xdc] sm:$0xf]
    %v99 = vld [vmem:[%s0 + $0xe0] sm:$0xf]
    %v100 = vld [vmem:[%s0 + $0xe4] sm:$0xf]
    %v101 = vld [vmem:[%s0 + $0xe8] sm:$0xf]
    %v102 = vld [vmem:[%s0 + $0xec] sm:$0xf]
    %v103 = vld [vmem:[%s0 + $0xf0] sm:$0xf]
    %v104 = vld [vmem:[%s0 + $0xf4] sm:$0xf]
    %v105 = vld [vmem:[%s0 + $0xf8] sm:$0xf]
    %v106 = vld [vmem:[%s0 + $0xfc] sm:$0xf]
    %v123 = vunpack.c.l.b16 %v27
    %v124 = vunpack.c.h.b16 %v27
    %v125 = vunpack.c.l.b16 %v28
    %v126 = vunpack.c.h.b16 %v28
    %v127 = vunpack.c.l.b16 %v29
    %v128 = vunpack.c.h.b16 %v29
    %v129 = vunpack.c.l.b16 %v30
    %v130 = vunpack.c.h.b16 %v30
    %v131 = vunpack.c.l.b16 %v31
    %v132 = vunpack.c.h.b16 %v31
    %v133 = vunpack.c.l.b16 %v32
    %v134 = vunpack.c.h.b16 %v32
    %v135 = vunpack.c.l.b16 %v33
    %v136 = vunpack.c.h.b16 %v33
    %v137 = vunpack.c.l.b16 %v34
    %v138 = vunpack.c.h.b16 %v34
    %v139 = vunpack.c.l.b16 %v35
    %v140 = vunpack.c.h.b16 %v35
    %v141 = vunpack.c.l.b16 %v36
    %v142 = vunpack.c.h.b16 %v36
    %v143 = vunpack.c.l.b16 %v37
    %v144 = vunpack.c.h.b16 %v37
    %v145 = vunpack.c.l.b16 %v38
    %v146 = vunpack.c.h.b16 %v38
    %v147 = vunpack.c.l.b16 %v39
    %v148 = vunpack.c.h.b16 %v39
    %v149 = vunpack.c.l.b16 %v40
    %v150 = vunpack.c.h.b16 %v40
    %v151 = vunpack.c.l.b16 %v41
    %v152 = vunpack.c.h.b16 %v41
    %v153 = vunpack.c.l.b16 %v42
    %v154 = vunpack.c.h.b16 %v42
    %v155 = vpack.c.b16 %v127, %v123
    %v156 = vpack.c.b16 %v128, %v124
    %v157 = vpack.c.b16 %v129, %v125
    %v158 = vpack.c.b16 %v130, %v126
    %v159 = vpack.c.b16 %v135, %v131
    %v160 = vpack.c.b16 %v136, %v132
    %v161 = vpack.c.b16 %v137, %v133
    %v162 = vpack.c.b16 %v138, %v134
    %v163 = vpack.c.b16 %v143, %v139
    %v164 = vpack.c.b16 %v144, %v140
    %v165 = vpack.c.b16 %v145, %v141
    %v166 = vpack.c.b16 %v146, %v142
    %v167 = vpack.c.b16 %v151, %v147
    %v168 = vpack.c.b16 %v152, %v148
    %v169 = vpack.c.b16 %v153, %v149
    %v170 = vpack.c.b16 %v154, %v150
    %v251 = vunpack.c.l.b16 %v43
    %v252 = vunpack.c.l.b16 %v44
    %v253 = vunpack.c.l.b16 %v45
    %v254 = vunpack.c.l.b16 %v46
    %v255 = vunpack.c.l.b16 %v47
    %v256 = vunpack.c.l.b16 %v48
    %v257 = vunpack.c.l.b16 %v49
    %v258 = vunpack.c.l.b16 %v50
    %v259 = vunpack.c.l.b16 %v51
    %v260 = vunpack.c.l.b16 %v52
    %v261 = vunpack.c.l.b16 %v53
    %v262 = vunpack.c.l.b16 %v54
    %v263 = vunpack.c.l.b16 %v55
    %v264 = vunpack.c.l.b16 %v56
    %v265 = vunpack.c.l.b16 %v57
    %v266 = vunpack.c.l.b16 %v58
    %v267 = vunpack.c.l.b16 %v59
    %v268 = vunpack.c.l.b16 %v60
    %v269 = vunpack.c.l.b16 %v61
    %v270 = vunpack.c.l.b16 %v62
    %v271 = vunpack.c.l.b16 %v63
    %v272 = vunpack.c.l.b16 %v64
    %v273 = vunpack.c.l.b16 %v65
    %v274 = vunpack.c.l.b16 %v66
    %v275 = vunpack.c.l.b16 %v67
    %v276 = vunpack.c.l.b16 %v68
    %v277 = vunpack.c.l.b16 %v69
    %v278 = vunpack.c.l.b16 %v70
    %v279 = vunpack.c.l.b16 %v71
    %v280 = vunpack.c.l.b16 %v72
    %v281 = vunpack.c.l.b16 %v73
    %v282 = vunpack.c.l.b16 %v74
    %v283 = vunpack.c.l.b16 %v75
    %v284 = vunpack.c.l.b16 %v76
    %v285 = vunpack.c.l.b16 %v77
    %v286 = vunpack.c.l.b16 %v78
    %v287 = vunpack.c.l.b16 %v79
    %v288 = vunpack.c.l.b16 %v80
    %v289 = vunpack.c.l.b16 %v81
    %v290 = vunpack.c.l.b16 %v82
    %v291 = vunpack.c.l.b16 %v83
    %v292 = vunpack.c.l.b16 %v84
    %v293 = vunpack.c.l.b16 %v85
    %v294 = vunpack.c.l.b16 %v86
    %v295 = vunpack.c.l.b16 %v87
    %v296 = vunpack.c.l.b16 %v88
    %v297 = vunpack.c.l.b16 %v89
    %v298 = vunpack.c.l.b16 %v90
    %v299 = vunpack.c.l.b16 %v91
    %v300 = vunpack.c.l.b16 %v92
    %v301 = vunpack.c.l.b16 %v93
    %v302 = vunpack.c.l.b16 %v94
    %v303 = vunpack.c.l.b16 %v95
    %v304 = vunpack.c.l.b16 %v96
    %v305 = vunpack.c.l.b16 %v97
    %v306 = vunpack.c.l.b16 %v98
    %v307 = vunpack.c.l.b16 %v99
    %v308 = vunpack.c.l.b16 %v100
    %v309 = vunpack.c.l.b16 %v101
    %v310 = vunpack.c.l.b16 %v102
    %v311 = vunpack.c.l.b16 %v103
    %v312 = vunpack.c.l.b16 %v104
    %v313 = vunpack.c.l.b16 %v105
    %v314 = vunpack.c.l.b16 %v106
    %v315 = vpack.c.b16 %v252, %v251
    %v316 = vpack.c.b16 %v254, %v253
    %v317 = vpack.c.b16 %v256, %v255
    %v318 = vpack.c.b16 %v258, %v257
    %v319 = vpack.c.b16 %v260, %v259
    %v320 = vpack.c.b16 %v262, %v261
    %v321 = vpack.c.b16 %v264, %v263
    %v322 = vpack.c.b16 %v266, %v265
    %v323 = vpack.c.b16 %v268, %v267
    %v324 = vpack.c.b16 %v270, %v269
    %v325 = vpack.c.b16 %v272, %v271
    %v326 = vpack.c.b16 %v274, %v273
    %v327 = vpack.c.b16 %v276, %v275
    %v328 = vpack.c.b16 %v278, %v277
    %v329 = vpack.c.b16 %v280, %v279
    %v330 = vpack.c.b16 %v282, %v281
    %v331 = vpack.c.b16 %v284, %v283
    %v332 = vpack.c.b16 %v286, %v285
    %v333 = vpack.c.b16 %v288, %v287
    %v334 = vpack.c.b16 %v290, %v289
    %v335 = vpack.c.b16 %v292, %v291
    %v336 = vpack.c.b16 %v294, %v293
    %v337 = vpack.c.b16 %v296, %v295
    %v338 = vpack.c.b16 %v298, %v297
    %v339 = vpack.c.b16 %v300, %v299
    %v340 = vpack.c.b16 %v302, %v301
    %v341 = vpack.c.b16 %v304, %v303
    %v342 = vpack.c.b16 %v306, %v305
    %v343 = vpack.c.b16 %v308, %v307
    %v344 = vpack.c.b16 %v310, %v309
    %v345 = vpack.c.b16 %v312, %v311
    %v346 = vpack.c.b16 %v314, %v313
    %379 = vmatprep.subr.bf16.mxu0 0
    %380 = vmatpush1.bf16.msra.mxu0 %v315
    %381 = vmatprep.subr.bf16.mxu0 0
    %382 = vmatpush1.bf16.msra.mxu0 %v316
    %383 = vmatprep.subr.bf16.mxu0 0
    %384 = vmatpush1.bf16.msra.mxu0 %v317
    %385 = vmatprep.subr.bf16.mxu0 0
    %386 = vmatpush1.bf16.msra.mxu0 %v318
    %387 = vmatprep.subr.bf16.mxu0 0
    %388 = vmatpush1.bf16.msra.mxu0 %v319
    %389 = vmatprep.subr.bf16.mxu0 0
    %390 = vmatpush1.bf16.msra.mxu0 %v320
    %391 = vmatprep.subr.bf16.mxu0 0
    %392 = vmatpush1.bf16.msra.mxu0 %v321
    %393 = vmatprep.subr.bf16.mxu0 0
    %394 = vmatpush1.bf16.msra.mxu0 %v322
    %395 = vmatprep.subr.bf16.mxu0 0
    %396 = vmatpush1.bf16.msra.mxu0 %v323
    %397 = vmatprep.subr.bf16.mxu0 0
    %398 = vmatpush1.bf16.msra.mxu0 %v324
    %399 = vmatprep.subr.bf16.mxu0 0
    %400 = vmatpush1.bf16.msra.mxu0 %v325
    %401 = vmatprep.subr.bf16.mxu0 0
    %402 = vmatpush1.bf16.msra.mxu0 %v326
    %403 = vmatprep.subr.bf16.mxu0 0
    %404 = vmatpush1.bf16.msra.mxu0 %v327
    %405 = vmatprep.subr.bf16.mxu0 0
    %406 = vmatpush1.bf16.msra.mxu0 %v328
    %407 = vmatprep.subr.bf16.mxu0 0
    %408 = vmatpush1.bf16.msra.mxu0 %v329
    %409 = vmatprep.subr.bf16.mxu0 0
    %410 = vmatpush1.bf16.msra.mxu0 %v330
    %411 = vmatprep.mubr.bf16.mxu0 %v156
    %412 = vmatmul.mubr.bf16.gmra.mrb[0].mxu0 %v155
    %v413 = vpop.f32.mrb[0].mxu0
    %v414 = vadd.f32 0.0, %v413
    %v415 = vpop.f32.mrb[0].mxu0
    %v416 = vpop.f32.mrb[0].mxu0
    %v417 = vadd.f32 0.0, %v416
    %v418 = vpop.f32.mrb[0].mxu0
    %419 = vmatprep.mubr.bf16.mxu0 %v160
    %420 = vmatmul.mubr.bf16.gmra.mrb[0].mxu0 %v159
    %v421 = vpop.f32.mrb[0].mxu0
    %v422 = vadd.f32 0.0, %v421
    %v423 = vpop.f32.mrb[0].mxu0
    %v424 = vpop.f32.mrb[0].mxu0
    %v425 = vadd.f32 0.0, %v424
    %v426 = vpop.f32.mrb[0].mxu0
    %427 = vmatprep.mubr.bf16.mxu0 %v164
    %428 = vmatmul.mubr.bf16.gmra.mrb[0].mxu0 %v163
    %v429 = vpop.f32.mrb[0].mxu0
    %v430 = vadd.f32 0.0, %v429
    %v431 = vpop.f32.mrb[0].mxu0
    %v432 = vpop.f32.mrb[0].mxu0
    %v433 = vadd.f32 0.0, %v432
    %v434 = vpop.f32.mrb[0].mxu0
    %435 = vmatprep.mubr.bf16.mxu0 %v168
    %436 = vmatmul.mubr.bf16.gmra.mrb[0].mxu0 %v167
    %v437 = vpop.f32.mrb[0].mxu0
    %v438 = vadd.f32 0.0, %v437
    %v439 = vpop.f32.mrb[0].mxu0
    %v440 = vpop.f32.mrb[0].mxu0
    %v441 = vadd.f32 0.0, %v440
    %v442 = vpop.f32.mrb[0].mxu0
    %443 = vdwg.mxu0
    %444 = vmatprep.subr.bf16.mxu0 0
    %445 = vmatpush1.bf16.msra.mxu0 %v331
    %446 = vmatprep.subr.bf16.mxu0 0
    %447 = vmatpush1.bf16.msra.mxu0 %v332
    %448 = vmatprep.subr.bf16.mxu0 0
    %449 = vmatpush1.bf16.msra.mxu0 %v333
    %450 = vmatprep.subr.bf16.mxu0 0
    %451 = vmatpush1.bf16.msra.mxu0 %v334
    %452 = vmatprep.subr.bf16.mxu0 0
    %453 = vmatpush1.bf16.msra.mxu0 %v335
    %454 = vmatprep.subr.bf16.mxu0 0
    %455 = vmatpush1.bf16.msra.mxu0 %v336
    %456 = vmatprep.subr.bf16.mxu0 0
    %457 = vmatpush1.bf16.msra.mxu0 %v337
    %458 = vmatprep.subr.bf16.mxu0 0
    %459 = vmatpush1.bf16.msra.mxu0 %v338
    %460 = vmatprep.subr.bf16.mxu0 0
    %461 = vmatpush1.bf16.msra.mxu0 %v339
    %462 = vmatprep.subr.bf16.mxu0 0
    %463 = vmatpush1.bf16.msra.mxu0 %v340
    %464 = vmatprep.subr.bf16.mxu0 0
    %465 = vmatpush1.bf16.msra.mxu0 %v341
    %466 = vmatprep.subr.bf16.mxu0 0
    %467 = vmatpush1.bf16.msra.mxu0 %v342
    %468 = vmatprep.subr.bf16.mxu0 0
    %469 = vmatpush1.bf16.msra.mxu0 %v343
    %470 = vmatprep.subr.bf16.mxu0 0
    %471 = vmatpush1.bf16.msra.mxu0 %v344
    %472 = vmatprep.subr.bf16.mxu0 0
    %473 = vmatpush1.bf16.msra.mxu0 %v345
    %474 = vmatprep.subr.bf16.mxu0 0
    %475 = vmatpush1.bf16.msra.mxu0 %v346
    %476 = vmatprep.mubr.bf16.mxu0 %v158
    %477 = vmatmul.mubr.bf16.gmra.mrb[0].mxu0 %v157
    %v478 = vpop.f32.mrb[0].mxu0
    %v479 = vadd.f32 %v414, %v478
    %v480 = vpop.f32.mrb[0].mxu0
    %v481 = vpop.f32.mrb[0].mxu0
    %v482 = vadd.f32 %v417, %v481
    %v483 = vpop.f32.mrb[0].mxu0
    %484 = vmatprep.mubr.bf16.mxu0 %v162
    %485 = vmatmul.mubr.bf16.gmra.mrb[0].mxu0 %v161
    %v486 = vpop.f32.mrb[0].mxu0
    %v487 = vadd.f32 %v422, %v486
    %v488 = vpop.f32.mrb[0].mxu0
    %v489 = vpop.f32.mrb[0].mxu0
    %v490 = vadd.f32 %v425, %v489
    %v491 = vpop.f32.mrb[0].mxu0
    %492 = vmatprep.mubr.bf16.mxu0 %v166
    %493 = vmatmul.mubr.bf16.gmra.mrb[0].mxu0 %v165
    %v494 = vpop.f32.mrb[0].mxu0
    %v495 = vadd.f32 %v430, %v494
    %v496 = vpop.f32.mrb[0].mxu0
    %v497 = vpop.f32.mrb[0].mxu0
    %v498 = vadd.f32 %v433, %v497
    %v499 = vpop.f32.mrb[0].mxu0
    %500 = vmatprep.mubr.bf16.mxu0 %v170
    %501 = vmatmul.mubr.bf16.gmra.mrb[0].mxu0 %v169
    %v502 = vpop.f32.mrb[0].mxu0
    %v503 = vadd.f32 %v438, %v502
    %v504 = vpop.f32.mrb[0].mxu0
    %v505 = vpop.f32.mrb[0].mxu0
    %v506 = vadd.f32 %v441, %v505
    %v507 = vpop.f32.mrb[0].mxu0
    %508 = vdwg.mxu0
    %vm509 = vcmask 261120
    %v510 = vsel %vm509, %v479, 0.0
    %511 = vadd.xlane.f32.xlu0 %v510
    %v512 = vpop.xlane.xlu0 %511
    %v513 = vsel %vm509, %v482, 0.0
    %514 = vadd.xlane.f32.xlu0 %v513
    %v515 = vpop.xlane.xlu0 %514
    %v516 = vsel %vm509, %v487, 0.0
    %517 = vadd.xlane.f32.xlu0 %v516
    %v518 = vpop.xlane.xlu0 %517
    %v519 = vsel %vm509, %v490, 0.0
    %520 = vadd.xlane.f32.xlu0 %v519
    %v521 = vpop.xlane.xlu0 %520
    %v522 = vsel %vm509, %v495, 0.0
    %523 = vadd.xlane.f32.xlu0 %v522
    %v524 = vpop.xlane.xlu0 %523
    %v525 = vsel %vm509, %v498, 0.0
    %526 = vadd.xlane.f32.xlu0 %v525
    %v527 = vpop.xlane.xlu0 %526
    %v528 = vsel %vm509, %v503, 0.0
    %529 = vadd.xlane.f32.xlu0 %v528
    %v530 = vpop.xlane.xlu0 %529
    %v531 = vsel %vm509, %v506, 0.0
    %532 = vadd.xlane.f32.xlu0 %v531
    %v533 = vpop.xlane.xlu0 %532
    %v534 = vmul.f32 %v512, 0.03125
    %v535 = vmul.f32 %v515, 0.03125
    %v536 = vmul.f32 %v518, 0.03125
    %v537 = vmul.f32 %v521, 0.03125
    %v538 = vmul.f32 %v524, 0.03125
    %v539 = vmul.f32 %v527, 0.03125
    %v540 = vmul.f32 %v530, 0.03125
    %v541 = vmul.f32 %v533, 0.03125
    %v542 = vsub.f32 %v479, %v534
    %v543 = vsub.f32 %v482, %v535
    %v544 = vsub.f32 %v487, %v536
    %v545 = vsub.f32 %v490, %v537
    %v546 = vsub.f32 %v495, %v538
    %v547 = vsub.f32 %v498, %v539
    %v548 = vsub.f32 %v503, %v540
    %v549 = vsub.f32 %v506, %v541
    %v550 = vmul.f32 %v542, %v542
    %v551 = vmul.f32 %v543, %v543
    %v552 = vmul.f32 %v544, %v544
    %v553 = vmul.f32 %v545, %v545
    %v554 = vmul.f32 %v546, %v546
    %v555 = vmul.f32 %v547, %v547
    %v556 = vmul.f32 %v548, %v548
    %v557 = vmul.f32 %v549, %v549
    %v558 = vsel %vm509, %v550, 0.0
    %559 = vadd.xlane.f32.xlu0 %v558
    %v560 = vpop.xlane.xlu0 %559
    %v561 = vsel %vm509, %v551, 0.0
    %562 = vadd.xlane.f32.xlu0 %v561
    %v563 = vpop.xlane.xlu0 %562
    %v564 = vsel %vm509, %v552, 0.0
    %565 = vadd.xlane.f32.xlu0 %v564
    %v566 = vpop.xlane.xlu0 %565
    %v567 = vsel %vm509, %v553, 0.0
    %568 = vadd.xlane.f32.xlu0 %v567
    %v569 = vpop.xlane.xlu0 %568
    %v570 = vsel %vm509, %v554, 0.0
    %571 = vadd.xlane.f32.xlu0 %v570
    %v572 = vpop.xlane.xlu0 %571
    %v573 = vsel %vm509, %v555, 0.0
    %574 = vadd.xlane.f32.xlu0 %v573
    %v575 = vpop.xlane.xlu0 %574
    %v576 = vsel %vm509, %v556, 0.0
    %577 = vadd.xlane.f32.xlu0 %v576
    %v578 = vpop.xlane.xlu0 %577
    %v579 = vsel %vm509, %v557, 0.0
    %580 = vadd.xlane.f32.xlu0 %v579
    %v581 = vpop.xlane.xlu0 %580
    %v582 = vmul.f32 %v560, 0.03125
    %v583 = vmul.f32 %v563, 0.03125
    %v584 = vmul.f32 %v566, 0.03125
    %v585 = vmul.f32 %v569, 0.03125
    %v586 = vmul.f32 %v572, 0.03125
    %v587 = vmul.f32 %v575, 0.03125
    %v588 = vmul.f32 %v578, 0.03125
    %v589 = vmul.f32 %v581, 0.03125
    %v590 = vmax.f32 %v582, 0.0
    %v591 = vmax.f32 %v583, 0.0
    %v592 = vmax.f32 %v584, 0.0
    %v593 = vmax.f32 %v585, 0.0
    %v594 = vmax.f32 %v586, 0.0
    %v595 = vmax.f32 %v587, 0.0
    %v596 = vmax.f32 %v588, 0.0
    %v597 = vmax.f32 %v589, 0.0
    %v598 = vadd.f32 %v590, 1e-05
    %v599 = vadd.f32 %v591, 1e-05
    %v600 = vadd.f32 %v592, 1e-05
    %v601 = vadd.f32 %v593, 1e-05
    %v602 = vadd.f32 %v594, 1e-05
    %v603 = vadd.f32 %v595, 1e-05
    %v604 = vadd.f32 %v596, 1e-05
    %v605 = vadd.f32 %v597, 1e-05
    %v606 = vrsqrt.pop %v598
    %v607 = vrsqrt.pop %v599
    %v608 = vrsqrt.pop %v600
    %v609 = vrsqrt.pop %v601
    %v610 = vrsqrt.pop %v602
    %v611 = vrsqrt.pop %v603
    %v612 = vrsqrt.pop %v604
    %v613 = vrsqrt.pop %v605
    %v614 = vld [vmem:[%s2] sm:$0xff]
    %v615 = vld [vmem:[%s2 + $0x8] sm:$0xff]
    %v616 = vld [vmem:[%s2 + $0x10] sm:$0xff]
    %v617 = vld [vmem:[%s2 + $0x18] sm:$0xff]
    %v618 = vld [vmem:[%s2 + $0x20] sm:$0xff]
    %v619 = vld [vmem:[%s2 + $0x28] sm:$0xff]
    %v620 = vld [vmem:[%s2 + $0x30] sm:$0xff]
    %v621 = vld [vmem:[%s2 + $0x38] sm:$0xff]
    %v622 = vmul.f32 %v614, %v606
    %v623 = vmul.f32 %v615, %v607
    %v624 = vmul.f32 %v616, %v608
    %v625 = vmul.f32 %v617, %v609
    %v626 = vmul.f32 %v618, %v610
    %v627 = vmul.f32 %v619, %v611
    %v628 = vmul.f32 %v620, %v612
    %v629 = vmul.f32 %v621, %v613
    %631 = vset.pattern.permute.xlu0 0
    %632 = vperm.xlu0 %631, %v622
    %v633 = vpop.permute.xlu0 %632
    %636 = vset.pattern.permute.xlu0 0
    %637 = vperm.xlu0 %636, %v623
    %v638 = vpop.permute.xlu0 %637
    %641 = vset.pattern.permute.xlu0 0
    %642 = vperm.xlu0 %641, %v624
    %v643 = vpop.permute.xlu0 %642
    %646 = vset.pattern.permute.xlu0 0
    %647 = vperm.xlu0 %646, %v625
    %v648 = vpop.permute.xlu0 %647
    %651 = vset.pattern.permute.xlu0 0
    %652 = vperm.xlu0 %651, %v626
    %v653 = vpop.permute.xlu0 %652
    %656 = vset.pattern.permute.xlu0 0
    %657 = vperm.xlu0 %656, %v627
    %v658 = vpop.permute.xlu0 %657
    %661 = vset.pattern.permute.xlu0 0
    %662 = vperm.xlu0 %661, %v628
    %v663 = vpop.permute.xlu0 %662
    %666 = vset.pattern.permute.xlu0 0
    %667 = vperm.xlu0 %666, %v629
    %v668 = vpop.permute.xlu0 %667
    %v670 = vmul.f32 %v542, %v633
    %v671 = vmul.f32 %v543, %v638
    %v672 = vmul.f32 %v544, %v643
    %v673 = vmul.f32 %v545, %v648
    %v674 = vmul.f32 %v546, %v653
    %v675 = vmul.f32 %v547, %v658
    %v676 = vmul.f32 %v548, %v663
    %v677 = vmul.f32 %v549, %v668
    %679 = vset.pattern.permute.xlu0 1
    %680 = vperm.xlu0 %679, %v614
    %v681 = vpop.permute.xlu0 %680
    %684 = vset.pattern.permute.xlu0 1
    %685 = vperm.xlu0 %684, %v615
    %v686 = vpop.permute.xlu0 %685
    %689 = vset.pattern.permute.xlu0 1
    %690 = vperm.xlu0 %689, %v616
    %v691 = vpop.permute.xlu0 %690
    %694 = vset.pattern.permute.xlu0 1
    %695 = vperm.xlu0 %694, %v617
    %v696 = vpop.permute.xlu0 %695
    %699 = vset.pattern.permute.xlu0 1
    %700 = vperm.xlu0 %699, %v618
    %v701 = vpop.permute.xlu0 %700
    %704 = vset.pattern.permute.xlu0 1
    %705 = vperm.xlu0 %704, %v619
    %v706 = vpop.permute.xlu0 %705
    %709 = vset.pattern.permute.xlu0 1
    %710 = vperm.xlu0 %709, %v620
    %v711 = vpop.permute.xlu0 %710
    %714 = vset.pattern.permute.xlu0 1
    %715 = vperm.xlu0 %714, %v621
    %v716 = vpop.permute.xlu0 %715
    %v718 = vadd.f32 %v670, %v681
    %v719 = vadd.f32 %v671, %v686
    %v720 = vadd.f32 %v672, %v691
    %v721 = vadd.f32 %v673, %v696
    %v722 = vadd.f32 %v674, %v701
    %v723 = vadd.f32 %v675, %v706
    %v724 = vadd.f32 %v676, %v711
    %v725 = vadd.f32 %v677, %v716
    %vm726 = vcmp.ge.f32.partialorder %v718, 0.0
    %vm727 = vcmp.ge.f32.partialorder %v719, 0.0
    %vm728 = vcmp.ge.f32.partialorder %v720, 0.0
    %vm729 = vcmp.ge.f32.partialorder %v721, 0.0
    %vm730 = vcmp.ge.f32.partialorder %v722, 0.0
    %vm731 = vcmp.ge.f32.partialorder %v723, 0.0
    %vm732 = vcmp.ge.f32.partialorder %v724, 0.0
    %vm733 = vcmp.ge.f32.partialorder %v725, 0.0
    %v734 = vmul.f32 %v718, 0.2
    %v735 = vmul.f32 %v719, 0.2
    %v736 = vmul.f32 %v720, 0.2
    %v737 = vmul.f32 %v721, 0.2
    %v738 = vmul.f32 %v722, 0.2
    %v739 = vmul.f32 %v723, 0.2
    %v740 = vmul.f32 %v724, 0.2
    %v741 = vmul.f32 %v725, 0.2
    %v742 = vsel %vm726, %v718, %v734
    %v743 = vsel %vm727, %v719, %v735
    %v744 = vsel %vm728, %v720, %v736
    %v745 = vsel %vm729, %v721, %v737
    %v746 = vsel %vm730, %v722, %v738
    %v747 = vsel %vm731, %v723, %v739
    %v748 = vsel %vm732, %v724, %v740
    %v749 = vsel %vm733, %v725, %v741
    %v750 = vld [vmem:[%s3] sm:$0xff]
    %v751 = vld [vmem:[%s3 + $0x8] sm:$0xff]
    %v752 = vld [vmem:[%s3 + $0x10] sm:$0xff]
    %v753 = vld [vmem:[%s3 + $0x18] sm:$0xff]
    %v754 = vld [vmem:[%s3 + $0x20] sm:$0xff]
    %v755 = vld [vmem:[%s3 + $0x28] sm:$0xff]
    %v756 = vld [vmem:[%s3 + $0x30] sm:$0xff]
    %v757 = vld [vmem:[%s3 + $0x38] sm:$0xff]
    %v758 = vmul.f32 %v742, %v750
    %v759 = vmul.f32 %v743, %v751
    %v760 = vmul.f32 %v744, %v752
    %v761 = vmul.f32 %v745, %v753
    %v762 = vmul.f32 %v746, %v754
    %v763 = vmul.f32 %v747, %v755
    %v764 = vmul.f32 %v748, %v756
    %v765 = vmul.f32 %v749, %v757
    %v766 = vld [vmem:[%s4] sm:$0xff]
    %v767 = vld [vmem:[%s4 + $0x8] sm:$0xff]
    %v768 = vld [vmem:[%s4 + $0x10] sm:$0xff]
    %v769 = vld [vmem:[%s4 + $0x18] sm:$0xff]
    %v771 = vsel %vm509, %v758, 0
    %v774 = vsel %vm509, %v759, 0
    %v777 = vsel %vm509, %v760, 0
    %v780 = vsel %vm509, %v761, 0
    %v783 = vsel %vm509, %v762, 0
    %v786 = vsel %vm509, %v763, 0
    %v789 = vsel %vm509, %v764, 0
    %v792 = vsel %vm509, %v765, 0
    %794 = vmatprep.subr.mxu0 0.0
    %795 = vmatpush1.msra.mxu0 %v766
    %796 = vmatprep.subr.mxu0 0.0
    %797 = vmatpush1.msra.mxu0 %v767
    %798 = vmatprep.subr.mxu0 0.0
    %799 = vmatpush1.msra.mxu0 %v768
    %800 = vmatprep.subr.mxu0 0.0
    %801 = vmatpush1.msra.mxu0 %v769
    %802 = vmatprep.subr.mxu0 0.0
    %803 = vmatpush1.msra.mxu0 0.0
    %804 = vmatprep.subr.mxu0 0.0
    %805 = vmatpush1.msra.mxu0 0.0
    %806 = vmatprep.subr.mxu0 0.0
    %807 = vmatpush1.msra.mxu0 0.0
    %808 = vmatprep.subr.mxu0 0.0
    %809 = vmatpush1.msra.mxu0 0.0
    %810 = vmatprep.subr.mxu0 0.0
    %811 = vmatpush1.msra.mxu0 0.0
    %812 = vmatprep.subr.mxu0 0.0
    %813 = vmatpush1.msra.mxu0 0.0
    %814 = vmatprep.subr.mxu0 0.0
    %815 = vmatpush1.msra.mxu0 0.0
    %816 = vmatprep.subr.mxu0 0.0
    %817 = vmatpush1.msra.mxu0 0.0
    %818 = vmatprep.subr.mxu0 0.0
    %819 = vmatpush1.msra.mxu0 0.0
    %820 = vmatprep.subr.mxu0 0.0
    %821 = vmatpush1.msra.mxu0 0.0
    %822 = vmatprep.subr.mxu0 0.0
    %823 = vmatpush1.msra.mxu0 0.0
    %824 = vmatprep.subr.mxu0 0.0
    %825 = vmatpush1.msra.mxu0 0.0
    %826 = vmatprep.subr.mxu0 0.0
    %827 = vmatpush1.msra.mxu0 0.0
    %828 = vmatprep.subr.mxu0 0.0
    %829 = vmatpush1.msra.mxu0 0.0
    %830 = vmatprep.subr.mxu0 0.0
    %831 = vmatpush1.msra.mxu0 0.0
    %832 = vmatprep.subr.mxu0 0.0
    %833 = vmatpush1.msra.mxu0 0.0
    %834 = vmatprep.subr.mxu0 0.0
    %835 = vmatpush1.msra.mxu0 0.0
    %836 = vmatprep.subr.mxu0 0.0
    %837 = vmatpush1.msra.mxu0 0.0
    %838 = vmatprep.subr.mxu0 0.0
    %839 = vmatpush1.msra.mxu0 0.0
    %840 = vmatprep.subr.mxu0 0.0
    %841 = vmatpush1.msra.mxu0 0.0
    %842 = vmatprep.subr.mxu0 0.0
    %843 = vmatpush1.msra.mxu0 0.0
    %844 = vmatprep.subr.mxu0 0.0
    %845 = vmatpush1.msra.mxu0 0.0
    %846 = vmatprep.subr.mxu0 0.0
    %847 = vmatpush1.msra.mxu0 0.0
    %848 = vmatprep.subr.mxu0 0.0
    %849 = vmatpush1.msra.mxu0 0.0
    %850 = vmatprep.subr.mxu0 0.0
    %851 = vmatpush1.msra.mxu0 0.0
    %852 = vmatprep.subr.mxu0 0.0
    %853 = vmatpush1.msra.mxu0 0.0
    %854 = vmatprep.subr.mxu0 0.0
    %855 = vmatpush1.msra.mxu0 0.0
    %856 = vmatprep.subr.mxu0 0.0
    %857 = vmatpush1.msra.mxu0 0.0
    %858 = vmatprep.mubr.f32.mxu0 0.0
    %859 = vmatmul.mubr.f32.gmra.mrb[0].mxu0 %v771
    %v860 = vpop.f32.mrb[0].mxu0
    %v861 = vadd.f32 0.0, %v860
    %v862 = vpop.f32.mrb[0].mxu0
    %863 = vmatprep.mubr.f32.mxu0 0.0
    %864 = vmatmul.mubr.f32.gmra.mrb[0].mxu0 %v774
    %v865 = vpop.f32.mrb[0].mxu0
    %v866 = vadd.f32 0.0, %v865
    %v867 = vpop.f32.mrb[0].mxu0
    %868 = vmatprep.mubr.f32.mxu0 0.0
    %869 = vmatmul.mubr.f32.gmra.mrb[0].mxu0 %v777
    %v870 = vpop.f32.mrb[0].mxu0
    %v871 = vadd.f32 0.0, %v870
    %v872 = vpop.f32.mrb[0].mxu0
    %873 = vmatprep.mubr.f32.mxu0 0.0
    %874 = vmatmul.mubr.f32.gmra.mrb[0].mxu0 %v780
    %v875 = vpop.f32.mrb[0].mxu0
    %v876 = vadd.f32 0.0, %v875
    %v877 = vpop.f32.mrb[0].mxu0
    %878 = vmatprep.mubr.f32.mxu0 0.0
    %879 = vmatmul.mubr.f32.gmra.mrb[0].mxu0 %v783
    %v880 = vpop.f32.mrb[0].mxu0
    %v881 = vadd.f32 0.0, %v880
    %v882 = vpop.f32.mrb[0].mxu0
    %883 = vmatprep.mubr.f32.mxu0 0.0
    %884 = vmatmul.mubr.f32.gmra.mrb[0].mxu0 %v786
    %v885 = vpop.f32.mrb[0].mxu0
    %v886 = vadd.f32 0.0, %v885
    %v887 = vpop.f32.mrb[0].mxu0
    %888 = vmatprep.mubr.f32.mxu0 0.0
    %889 = vmatmul.mubr.f32.gmra.mrb[0].mxu0 %v789
    %v890 = vpop.f32.mrb[0].mxu0
    %v891 = vadd.f32 0.0, %v890
    %v892 = vpop.f32.mrb[0].mxu0
    %893 = vmatprep.mubr.f32.mxu0 0.0
    %894 = vmatmul.mubr.f32.gmra.mrb[0].mxu0 %v792
    %v895 = vpop.f32.mrb[0].mxu0
    %v896 = vadd.f32 0.0, %v895
    %v897 = vpop.f32.mrb[0].mxu0
    %898 = vdwg.mxu0
    %vm899 = vcmask 15360
    %v900 = vsel %vm899, %v861, 0.0
    %v901 = vsel %vm899, %v866, 0.0
    %v902 = vadd.f32 %v900, %v901
    %v903 = vsel %vm899, %v871, 0.0
    %v904 = vadd.f32 %v902, %v903
    %v905 = vsel %vm899, %v876, 0.0
    %v906 = vadd.f32 %v904, %v905
    %v907 = vsel %vm899, %v881, 0.0
    %v908 = vadd.f32 %v906, %v907
    %v909 = vsel %vm899, %v886, 0.0
    %v910 = vadd.f32 %v908, %v909
    %v911 = vsel %vm899, %v891, 0.0
    %v912 = vadd.f32 %v910, %v911
    %v913 = vsel %vm899, %v896, 0.0
    %v914 = vadd.f32 %v912, %v913
    %v915 = vrot.slane %v914, 4
    %v916 = vadd.f32 %v914, %v915
    %v917 = vrot.slane %v916, 2
    %v918 = vadd.f32 %v916, %v917
    %v919 = vrot.slane %v918, 1
    %v920 = vadd.f32 %v918, %v919
    %v921 = vld [vmem:[#allocation2] sm:$0x1]
    %923 = vset.pattern.permute.xlu0 0
    %924 = vperm.xlu0 %923, %v921
    %v925 = vpop.permute.xlu0 %924
    %v927 = vlaneseq
    %v928 = vshrl.u32 %v927, 7
    %v929 = vsub.s32 0, %v928
    %v930 = vrot.slane %v925, %v929
    %v931 = vadd.f32 %v920, %v930
    %v932 = vxor.u32 %v931, 2147483648
    %v933 = vmul.f32 %v932, 1.442695
    %v934 = vpow.pop %v933
    %v935 = vadd.f32 %v934, 1.0
    %v936 = vrcp.pop %v935
    %v937 = vmul.f32 1.0, %v936
    %vm938 = vcmask 8192
    %939 = vst.msk [vmem:[#allocation3] sm:$0x1] %vm938, %v937
    // Predicated region
    $region26: #{discriminator_forward.7} parent=1 // pred_check
      _
    $region27: #{discriminator_forward.7} parent=1 // pred_check_branch
      %941 = sbr.rel (0) target = $region29
    $region28: #{discriminator_forward.7} parent=1 // pred_region
      %s943 = ssub.s32 16, 16
      %944 = vsyncadd [#allocation4], %s943
      %s946 = sshll.u32 [#allocation3], 4
      %s947 = int_to_ptr.vmem [resolvable:$true] %s946
      %949 = dma.vmem_to_hbm [thread:$0]  %s947, 16, %s6, [#allocation4]
    $region29: #{discriminator_forward.7} parent=1 // pred_fallthru
      _
    // Predicated region
    $region30: #{discriminator_forward.7} parent=1 // pred_check
      _
    $region31: #{discriminator_forward.7} parent=1 // pred_check_branch
      %951 = sbr.rel (0) target = $region33
    $region32: #{discriminator_forward.7} parent=1 // pred_region
      %952 = dma.done [#allocation4], 16
    $region33: #{discriminator_forward.7} parent=1 // pred_fallthru
      _
    %953 = vsyncpa [#allocation4], 1

</llo_original>
